<compile_context>
chip_gen: v7x
topology: tpu7x:2x2x1
jax: 0.10.0
libtpu: 0.0.40
codegen_flags: <defaults>
</compile_context>

<pallas_src>
import functools

import jax
import jax.numpy as jnp
import numpy as np
from jax.experimental import pallas as pl
from jax.experimental.pallas import tpu as pltpu


_TILE_VMEM_BUDGET = 24 * 1024 * 1024   # tile-planning budget (< 32 MiB scoped cap)
_VMEM_LIMIT_BYTES = 32 * 1024 * 1024   # safe on v5e / v6e / v7x


def _round_up(x, m):
    return (x + m - 1) // m * m


# ---------------------------------------------------------------------------
# Tile planner: largest tiles / full-K contraction that fit the VMEM budget
# ---------------------------------------------------------------------------
def _plan_tiles(M, K, Cout, *, extra_k=0, has_residual=False, out_itemsize=4,
                budget=_TILE_VMEM_BUDGET, force_k_tiles=False):
    Kp_full = _round_up(K, 128)

    def vmem_bytes(tm, tk, tn, k_tiled):
        b = 2 * tm * tk * 2            # patches tile (bf16, double buffered)
        b += 2 * tk * tn * 2           # weight tile
        b += 2 * 1 * tn * 4            # folded BN bias
        if extra_k:                    # fused 1x1 projection shortcut operands
            b += 2 * tm * extra_k * 2 + 2 * extra_k * tn * 2
        if has_residual:               # identity-shortcut residual tile
            b += 2 * tm * tn * 2
        b += 2 * tm * tn * out_itemsize
        if k_tiled:
            b += tm * tn * 4           # f32 accumulator scratch
        return b

    # K options: full-K first (no K grid axis), then 512/256/128 K-tiles.
    tk_opts = []
    if not force_k_tiles:
        tk_opts.append((Kp_full, False))
    for t in (512, 256, 128):
        if t < Kp_full or (force_k_tiles and t <= Kp_full):
            if (t, True) not in tk_opts:
                tk_opts.append((t, True))

    # M tiles: largest first; tiny M -> one block rounded to 8 sublanes.
    tm_opts = [t for t in (512, 256, 128) if t <= M] or [_round_up(M, 8)]

    # Cout tiles: prefer the full output width (lane-dense, legal since a block
    # dim equal to the full array dim is always allowed), else 512/256/128.
    tn_opts = []
    if Cout <= 512:
        tn_opts.append(Cout)
    for t in (512, 256, 128):
        if t <= Cout and t not in tn_opts:
            tn_opts.append(t)

    chosen = None
    for tk, k_tiled in tk_opts:            # abandon full-K last
        for tn in tn_opts:                 # keep tn large ...
            for tm in tm_opts:             # ... shrink tm first
                chosen = dict(tm=tm, tn=tn, tk=tk, k_tiled=k_tiled,
                              Kp=_round_up(K, tk))
                if vmem_bytes(tm, tk, tn, k_tiled) <= budget:
                    return chosen
    return chosen                          # nothing fit: smallest config tried


# ---------------------------------------------------------------------------
# Kernels
# ---------------------------------------------------------------------------
def _gemm_kernel_fullk(x_ref, w_ref, b_ref, *rest,
                       apply_relu, has_shortcut, has_residual):
    """out = [relu](x @ w + [s @ sw] + bias [+ residual]) — single K step."""
    rest = list(rest)
    s_ref = sw_ref = r_ref = None
    if has_shortcut:
        s_ref = rest.pop(0)
        sw_ref = rest.pop(0)
    if has_residual:
        r_ref = rest.pop(0)
    out_ref = rest.pop(0)

    acc = jnp.dot(x_ref[...], w_ref[...], preferred_element_type=jnp.float32)
    if has_shortcut:
        acc = acc + jnp.dot(s_ref[...], sw_ref[...],
                            preferred_element_type=jnp.float32)
    y = acc + b_ref[...]
    if has_residual:
        y = y + r_ref[...].astype(jnp.float32)
    if apply_relu:
        y = jnp.maximum(y, 0.0)
    out_ref[...] = y.astype(out_ref.dtype)


def _gemm_kernel_ktiled(x_ref, w_ref, b_ref, *rest,
                        apply_relu, has_shortcut, has_residual):
    """K-tiled fallback with f32 VMEM accumulator and pl.when init/finalize."""
    rest = list(rest)
    s_ref = sw_ref = r_ref = None
    if has_shortcut:
        s_ref = rest.pop(0)
        sw_ref = rest.pop(0)
    if has_residual:
        r_ref = rest.pop(0)
    out_ref, acc_ref = rest
    k = pl.program_id(2)

    @pl.when(k == 0)
    def _init():
        acc_ref[...] = jnp.zeros_like(acc_ref)

    acc_ref[...] += jnp.dot(x_ref[...], w_ref[...],
                            preferred_element_type=jnp.float32)

    @pl.when(k == pl.num_programs(2) - 1)
    def _finalize():
        y = acc_ref[...] + b_ref[...]
        if has_shortcut:                   # shortcut GEMM done once, at the end
            y = y + jnp.dot(s_ref[...], sw_ref[...],
                            preferred_element_type=jnp.float32)
        if has_residual:
            y = y + r_ref[...].astype(jnp.float32)
        if apply_relu:
            y = jnp.maximum(y, 0.0)
        out_ref[...] = y.astype(out_ref.dtype)


# ---------------------------------------------------------------------------
# Fused GEMM wrapper
# ---------------------------------------------------------------------------
def fused_gemm(plan, patches, w, bias, *, shortcut=None, shortcut_w=None,
               residual=None, relu=True, out_dtype=jnp.float32):
    """[relu]( patches @ w + [shortcut @ shortcut_w] + bias [+ residual] ).

    patches  : (M, Kp)  bf16, trailing Kp-K columns are zero.
    w        : (K, Cout) f32, BN scale folded into columns.
    bias     : (Cout,)   f32, folded BN bias.
    shortcut : (M, Ck)   bf16, zero-padded K columns; shortcut_w: (Ck, Cout).
    residual : (M, Cout) bf16, added in the epilogue.
    """
    M, Kp = patches.shape
    K, Cout = w.shape
    tm, tn, tk, k_tiled = plan["tm"], plan["tn"], plan["tk"], plan["k_tiled"]
    assert Kp == plan["Kp"] and Kp % tk == 0

    # Only the small operands are padded / cast here (cheap); the big patch
    # matrix arrives already at the padded K width and ragged M/Cout edges are
    # handled by Pallas' masked boundary blocks.
    w_p = jnp.pad(w.astype(jnp.bfloat16), ((0, Kp - K), (0, 0)))
    bias_p = bias.astype(jnp.float32).reshape(1, Cout)

    has_shortcut = shortcut is not None
    has_residual = residual is not None
    gm, gn = pl.cdiv(M, tm), pl.cdiv(Cout, tn)

    args = [patches, w_p, bias_p]
    if k_tiled:
        grid = (gm, gn, Kp // tk)
        in_specs = [pl.BlockSpec((tm, tk), lambda i, j, k: (i, k)),
                    pl.BlockSpec((tk, tn), lambda i, j, k: (k, j)),
                    pl.BlockSpec((1, tn), lambda i, j, k: (0, j))]
        ij_spec = lambda shape: pl.BlockSpec(shape, lambda i, j, k: (i, j))
        row_spec = lambda shape: pl.BlockSpec(shape, lambda i, j, k: (i, 0))
        col_spec = lambda shape: pl.BlockSpec(shape, lambda i, j, k: (0, j))
        dims = ("parallel", "parallel", "arbitrary")
        scratch = [pltpu.VMEM((tm, tn), jnp.float32)]
        kernel_fn = _gemm_kernel_ktiled
    else:
        grid = (gm, gn)
        in_specs = [pl.BlockSpec((tm, Kp), lambda i, j: (i, 0)),
                    pl.BlockSpec((Kp, tn), lambda i, j: (0, j)),
                    pl.BlockSpec((1, tn), lambda i, j: (0, j))]
        ij_spec = lambda shape: pl.BlockSpec(shape, lambda i, j: (i, j))
        row_spec = lambda shape: pl.BlockSpec(shape, lambda i, j: (i, 0))
        col_spec = lambda shape: pl.BlockSpec(shape, lambda i, j: (0, j))
        dims = ("parallel", "parallel")
        scratch = []
        kernel_fn = _gemm_kernel_fullk

    if has_shortcut:
        Ck = shortcut.shape[1]
        args += [shortcut, shortcut_w.astype(jnp.bfloat16)]
        in_specs += [row_spec((tm, Ck)), col_spec((Ck, tn))]
    if has_residual:
        args.append(residual)
        in_specs.append(ij_spec((tm, tn)))

    # Advisory cost estimate (includes operand re-read factors).
    out_itemsize = jnp.dtype(out_dtype).itemsize
    patch_rereads = gn if k_tiled else 1        # (i,*) block constant over j
    flops = 2 * M * Kp * Cout
    bytes_acc = (M * Kp * 2 * patch_rereads + Kp * Cout * 2 * gm
                 + Cout * 4 * gm * gn + M * Cout * out_itemsize)
    if has_shortcut:
        Ck = shortcut.shape[1]
        flops += 2 * M * Ck * Cout
        bytes_acc += M * Ck * 2 + Ck * Cout * 2 * gm
    if has_residual:
        bytes_acc += M * Cout * 2

    kernel = functools.partial(kernel_fn, apply_relu=relu,
                               has_shortcut=has_shortcut,
                               has_residual=has_residual)

    return pl.pallas_call(
        kernel,
        out_shape=jax.ShapeDtypeStruct((M, Cout), out_dtype),
        grid=grid,
        in_specs=in_specs,
        out_specs=ij_spec((tm, tn)),
        scratch_shapes=scratch,
        compiler_params=pltpu.CompilerParams(
            dimension_semantics=dims,
            vmem_limit_bytes=_VMEM_LIMIT_BYTES),
        cost_estimate=pl.CostEstimate(flops=int(flops), transcendentals=0,
                                      bytes_accessed=int(bytes_acc)),
    )(*args)


# ---------------------------------------------------------------------------
# Glue: im2col (built at padded K width), weight flattening, BN folding
# ---------------------------------------------------------------------------
def im2col_3x3(x_nhwc, stride, k_pad_to):
    """(N,H,W,C) -> zero-tail-padded patches (N*Hout*Wout, k_pad_to).

    K order is (kh, kw, c); the k_pad_to - 9*C tail columns are zeros,
    appended inside the concat the im2col already performs (no extra pad pass).
    """
    N, H, W, C = x_nhwc.shape
    xp = jnp.pad(x_nhwc, ((0, 0), (1, 1), (1, 1), (0, 0)))
    Hout = (H - 1) // stride + 1
    Wout = (W - 1) // stride + 1
    pieces = []
    for kh in range(3):
        for kw in range(3):
            sl = xp[:, kh:kh + (Hout - 1) * stride + 1:stride,
                       kw:kw + (Wout - 1) * stride + 1:stride, :]
            pieces.append(sl)
    if k_pad_to > 9 * C:
        pieces.append(jnp.zeros((N, Hout, Wout, k_pad_to - 9 * C),
                                x_nhwc.dtype))
    p = jnp.concatenate(pieces, axis=-1)               # (N, Hout, Wout, k_pad_to)
    return p.reshape(N * Hout * Wout, k_pad_to), (N, Hout, Wout)


def flatten_conv_w(w_pt):
    """PyTorch (Cout, Cin, KH, KW) -> (KH*KW*Cin, Cout), K order (kh, kw, cin)."""
    Cout, Cin, KH, KW = w_pt.shape
    return jnp.transpose(w_pt, (2, 3, 1, 0)).reshape(KH * KW * Cin, Cout)


def fold_bn(gamma, beta, mean, var, conv_bias, eps):
    """bn(conv(x)+b) == conv(x) @ diag(scale) + bias  (inference mode)."""
    scale = gamma / jnp.sqrt(var + eps)
    bias = beta + scale * (conv_bias - mean)
    return scale, bias


# ---------------------------------------------------------------------------
# BasicBlock forward (Pallas path)
# ---------------------------------------------------------------------------
def basic_block_forward(x_nchw, params, stride,
                        tile_budget=_TILE_VMEM_BUDGET, force_k_tiles=False):
    eps = 1e-5
    x = jnp.transpose(x_nchw, (0, 2, 3, 1))            # NCHW -> NHWC
    N, H, W, Cin = x.shape
    Cout = params["w1"].shape[0]
    x_bf16 = x.astype(jnp.bfloat16)                    # bf16 activations
    projection = (stride != 1) or (Cin != Cout)
    plan_kw = dict(budget=tile_budget, force_k_tiles=force_k_tiles)

    # conv1(3x3, stride) + bn1 + relu : BN scale folded into weight columns
    s1, b1 = fold_bn(params["g1"], params["be1"], params["m1"], params["v1"],
                     params["b1"], eps)
    w1 = flatten_conv_w(params["w1"]) * s1[None, :]
    ho = (H - 1) // stride + 1
    wo = (W - 1) // stride + 1
    M = N * ho * wo
    plan1 = _plan_tiles(M, 9 * Cin, Cout, out_itemsize=2, **plan_kw)
    p1, _ = im2col_3x3(x_bf16, stride, plan1["Kp"])
    y1 = fused_gemm(plan1, p1, w1, b1, relu=True, out_dtype=jnp.bfloat16)
    y1 = y1.reshape(N, ho, wo, Cout)

    # conv2(3x3, s=1) + bn2 + shortcut + relu : one fused kernel
    s2, b2 = fold_bn(params["g2"], params["be2"], params["m2"], params["v2"],
                     params["b2"], eps)
    w2 = flatten_conv_w(params["w2"]) * s2[None, :]

    if projection:
        # 1x1-conv + BN projection shortcut fused as a second MXU contraction
        # inside the conv2 kernel (no concatenate / no HBM round trip).
        ss, bs = fold_bn(params["gs"], params["bes"], params["ms"], params["vs"],
                         params["bs"], eps)
        ws = flatten_conv_w(params["ws"]) * ss[None, :]
        Ck = _round_up(Cin, 128)
        xs = x_bf16[:, ::stride, ::stride, :].reshape(M, Cin)
        xs = jnp.pad(xs, ((0, 0), (0, Ck - Cin)))      # small: zero K padding
        ws = jnp.pad(ws, ((0, Ck - Cin), (0, 0)))
        plan2 = _plan_tiles(M, 9 * Cout, Cout, extra_k=Ck, out_itemsize=4,
                            **plan_kw)
        p2, _ = im2col_3x3(y1, 1, plan2["Kp"])
        out = fused_gemm(plan2, p2, w2, b2 + bs, shortcut=xs, shortcut_w=ws,
                         relu=True, out_dtype=jnp.float32)
    else:
        # Identity shortcut: residual added inside the kernel epilogue (bf16).
        plan2 = _plan_tiles(M, 9 * Cout, Cout, has_residual=True,
                            out_itemsize=4, **plan_kw)
        p2, _ = im2col_3x3(y1, 1, plan2["Kp"])
        res = x_bf16.reshape(M, Cout)
        out = fused_gemm(plan2, p2, w2, b2, residual=res, relu=True,
                         out_dtype=jnp.float32)

    out = out.reshape(N, ho, wo, Cout)
    return jnp.transpose(out, (0, 3, 1, 2))            # NHWC -> NCHW


# ---------------------------------------------------------------------------
# Pure-JAX f32 reference (PyTorch semantics) for correctness check
# ---------------------------------------------------------------------------
def basic_block_reference(x_nchw, params, stride):
    x = jnp.transpose(x_nchw, (0, 2, 3, 1)).astype(jnp.float32)
    eps = 1e-5

    def conv(xx, w_pt, b, s, pad):
        w = jnp.transpose(w_pt, (2, 3, 1, 0))          # HWIO
        y = jax.lax.conv_general_dilated(
            xx, w, (s, s), [(pad, pad), (pad, pad)],
            dimension_numbers=("NHWC", "HWIO", "NHWC"))
        return y + b

    def bn(y, g, be, m, v):
        return g * (y - m) / jnp.sqrt(v + eps) + be

    o = jax.nn.relu(bn(conv(x, params["w1"], params["b1"], stride, 1),
                       params["g1"], params["be1"], params["m1"], params["v1"]))
    o = bn(conv(o, params["w2"], params["b2"], 1, 1),
           params["g2"], params["be2"], params["m2"], params["v2"])
    Cin, Cout = x.shape[-1], params["w1"].shape[0]
    if stride != 1 or Cin != Cout:
        sc = bn(conv(x, params["ws"], params["bs"], stride, 0),
                params["gs"], params["bes"], params["ms"], params["vs"])
    else:
        sc = x
    o = jax.nn.relu(o + sc)
    return jnp.transpose(o, (0, 3, 1, 2))


# ---------------------------------------------------------------------------
# Deterministic synthetic parameters (matches nn.Module shapes)
# ---------------------------------------------------------------------------
def init_params(key, Cin, Cout):
    ks = jax.random.split(key, 18)
    f32 = jnp.float32
    p = {}
    p["w1"] = 0.1 * jax.random.normal(ks[0], (Cout, Cin, 3, 3), f32)
    p["b1"] = 0.1 * jax.random.normal(ks[1], (Cout,), f32)
    p["g1"] = 1.0 + 0.1 * jax.random.normal(ks[2], (Cout,), f32)
    p["be1"] = 0.1 * jax.random.normal(ks[3], (Cout,), f32)
    p["m1"] = 0.1 * jax.random.normal(ks[4], (Cout,), f32)
    p["v1"] = 1.0 + 0.1 * jnp.abs(jax.random.normal(ks[5], (Cout,), f32))
    p["w2"] = 0.1 * jax.random.normal(ks[6], (Cout, Cout, 3, 3), f32)
    p["b2"] = 0.1 * jax.random.normal(ks[7], (Cout,), f32)
    p["g2"] = 1.0 + 0.1 * jax.random.normal(ks[8], (Cout,), f32)
    p["be2"] = 0.1 * jax.random.normal(ks[9], (Cout,), f32)
    p["m2"] = 0.1 * jax.random.normal(ks[10], (Cout,), f32)
    p["v2"] = 1.0 + 0.1 * jnp.abs(jax.random.normal(ks[11], (Cout,), f32))
    p["ws"] = 0.1 * jax.random.normal(ks[12], (Cout, Cin, 1, 1), f32)
    p["bs"] = 0.1 * jax.random.normal(ks[13], (Cout,), f32)
    p["gs"] = 1.0 + 0.1 * jax.random.normal(ks[14], (Cout,), f32)
    p["bes"] = 0.1 * jax.random.normal(ks[15], (Cout,), f32)
    p["ms"] = 0.1 * jax.random.normal(ks[16], (Cout,), f32)
    p["vs"] = 1.0 + 0.1 * jnp.abs(jax.random.normal(ks[17], (Cout,), f32))
    return p


if __name__ == "__main__":
    key = jax.random.PRNGKey(0)
    fwd = jax.jit(basic_block_forward, static_argnums=(2, 3, 4))

    cases = [
        # (N, Cin, Cout, H, W, stride, force_k_tiles)
        (2, 4, 8, 16, 16, 1, False),   # projection shortcut, full-K path
        (2, 8, 8, 16, 16, 1, False),   # identity shortcut, full-K path
        (2, 4, 8, 16, 16, 2, False),   # projection shortcut, stride 2, full-K
        (2, 8, 8, 12, 12, 1, False),   # identity shortcut, ragged M tiles
        (2, 32, 32, 8, 8, 1, True),    # identity shortcut, K-tiled accumulation
        (2, 16, 32, 8, 8, 2, True),    # projection shortcut, K-tiled accumulation
    ]
    for (N, Cin, Cout, H, W, stride, force_k) in cases:
        key, kx, kp = jax.random.split(key, 3)
        x = jax.random.normal(kx, (N, Cin, H, W), jnp.float32)   # NCHW
        params = init_params(kp, Cin, Cout)

        out = jax.block_until_ready(
            fwd(x, params, stride, _TILE_VMEM_BUDGET, force_k))
        ref = basic_block_reference(x, params, stride)
        assert out.shape == ref.shape, (out.shape, ref.shape)
        # Tolerance accounts for bf16 MXU operands (f32 accumulation/epilogue).
        np.testing.assert_allclose(np.asarray(out), np.asarray(ref),
                                   rtol=5e-2, atol=7e-2)

    print("KERNEL_OK")
</pallas_src>

<mosaic_0001>
module attributes {stable_mosaic.version = 11 : i64} {
  func.func @_gemm_kernel_fullk(%arg0: i32, %arg1: i32, %arg2: memref<512x128xbf16, #tpu.memory_space<vmem>>, %arg3: memref<128x8xbf16, #tpu.memory_space<vmem>>, %arg4: memref<1x8xf32, #tpu.memory_space<vmem>>, %arg5: memref<512x8xbf16, #tpu.memory_space<vmem>>) attributes {dimension_semantics = [#tpu.dimension_semantics<parallel>, #tpu.dimension_semantics<parallel>], iteration_bounds = array<i64: 1, 1>, scalar_prefetch = 0 : i64, scratch_operands = 0 : i64, tpu.core_type = #tpu.core_type<tc>, window_params = [{transform_indices = @transform_0, window_bounds = array<i64: 512, 128>}, {transform_indices = @transform_1, window_bounds = array<i64: 128, 8>}, {transform_indices = @transform_2, window_bounds = array<i64: 1, 8>}, {transform_indices = @transform_3, window_bounds = array<i64: 512, 8>}]} {
    %c0 = arith.constant 0 : index
    %c0_0 = arith.constant 0 : index
    %0 = vector.load %arg2[%c0, %c0_0] : memref<512x128xbf16, #tpu.memory_space<vmem>>, vector<512x128xbf16>
    %c0_1 = arith.constant 0 : index
    %c0_2 = arith.constant 0 : index
    %1 = vector.load %arg3[%c0_1, %c0_2] : memref<128x8xbf16, #tpu.memory_space<vmem>>, vector<128x8xbf16>
    %cst = arith.constant dense<0.000000e+00> : vector<512x8xf32>
    %2 = tpu.matmul %0, %1, %cst {dimension_numbers = #tpu.dot_dimension_numbers<[1], [0], [0], [1], [0, 0, 1, 1], [], []>} : vector<512x128xbf16>, vector<128x8xbf16>, vector<512x8xf32> -> vector<512x8xf32>
    %c0_3 = arith.constant 0 : index
    %c0_4 = arith.constant 0 : index
    %3 = vector.load %arg4[%c0_3, %c0_4] : memref<1x8xf32, #tpu.memory_space<vmem>>, vector<1x8xf32>
    %4 = vector.broadcast %3 : vector<1x8xf32> to vector<512x8xf32>
    %5 = arith.addf %2, %4 : vector<512x8xf32>
    %cst_5 = arith.constant 0.000000e+00 : f32
    %6 = vector.broadcast %cst_5 : f32 to vector<512x8xf32>
    %7 = arith.maximumf %5, %6 : vector<512x8xf32>
    %8 = arith.truncf %7 : vector<512x8xf32> to vector<512x8xbf16>
    %c0_6 = arith.constant 0 : index
    %c0_7 = arith.constant 0 : index
    %9 = vector.load %arg5[%c0_6, %c0_7] : memref<512x8xbf16, #tpu.memory_space<vmem>>, vector<512x8xbf16>
    tpu.vector_store %arg5[%c0_6, %c0_7], %8 {strides = array<i32>} : memref<512x8xbf16, #tpu.memory_space<vmem>>, vector<512x8xbf16>,
    return
  }
  func.func @transform_0(%arg0: i32, %arg1: i32) -> (i32, i32) {
    %c0_i32 = arith.constant 0 : i32
    %c0_i32_0 = arith.constant 0 : i32
    return %arg0, %c0_i32 : i32, i32
  }
  func.func @transform_1(%arg0: i32, %arg1: i32) -> (i32, i32) {
    %c0_i32 = arith.constant 0 : i32
    %c0_i32_0 = arith.constant 0 : i32
    return %c0_i32, %arg1 : i32, i32
  }
  func.func @transform_2(%arg0: i32, %arg1: i32) -> (i32, i32) {
    %c0_i32 = arith.constant 0 : i32
    %c0_i32_0 = arith.constant 0 : i32
    return %c0_i32, %arg1 : i32, i32
  }
  func.func @transform_3(%arg0: i32, %arg1: i32) -> (i32, i32) {
    %c0_i32 = arith.constant 0 : i32
    return %arg0, %arg1 : i32, i32
  }
}

module attributes {stable_mosaic.version = 11 : i64} {
  func.func @_gemm_kernel_fullk(%arg0: i32, %arg1: i32, %arg2: memref<512x128xbf16, #tpu.memory_space<vmem>>, %arg3: memref<128x8xbf16, #tpu.memory_space<vmem>>, %arg4: memref<1x8xf32, #tpu.memory_space<vmem>>, %arg5: memref<512x128xbf16, #tpu.memory_space<vmem>>, %arg6: memref<128x8xbf16, #tpu.memory_space<vmem>>, %arg7: memref<512x8xf32, #tpu.memory_space<vmem>>) attributes {dimension_semantics = [#tpu.dimension_semantics<parallel>, #tpu.dimension_semantics<parallel>], iteration_bounds = array<i64: 1, 1>, scalar_prefetch = 0 : i64, scratch_operands = 0 : i64, tpu.core_type = #tpu.core_type<tc>, window_params = [{transform_indices = @transform_0, window_bounds = array<i64: 512, 128>}, {transform_indices = @transform_1, window_bounds = array<i64: 128, 8>}, {transform_indices = @transform_2, window_bounds = array<i64: 1, 8>}, {transform_indices = @transform_3, window_bounds = array<i64: 512, 128>}, {transform_indices = @transform_4, window_bounds = array<i64: 128, 8>}, {transform_indices = @transform_5, window_bounds = array<i64: 512, 8>}]} {
    %c0 = arith.constant 0 : index
    %c0_0 = arith.constant 0 : index
    %0 = vector.load %arg2[%c0, %c0_0] : memref<512x128xbf16, #tpu.memory_space<vmem>>, vector<512x128xbf16>
    %c0_1 = arith.constant 0 : index
    %c0_2 = arith.constant 0 : index
    %1 = vector.load %arg3[%c0_1, %c0_2] : memref<128x8xbf16, #tpu.memory_space<vmem>>, vector<128x8xbf16>
    %cst = arith.constant dense<0.000000e+00> : vector<512x8xf32>
    %2 = tpu.matmul %0, %1, %cst {dimension_numbers = #tpu.dot_dimension_numbers<[1], [0], [0], [1], [0, 0, 1, 1], [], []>} : vector<512x128xbf16>, vector<128x8xbf16>, vector<512x8xf32> -> vector<512x8xf32>
    %c0_3 = arith.constant 0 : index
    %c0_4 = arith.constant 0 : index
    %3 = vector.load %arg5[%c0_3, %c0_4] : memref<512x128xbf16, #tpu.memory_space<vmem>>, vector<512x128xbf16>
    %c0_5 = arith.constant 0 : index
    %c0_6 = arith.constant 0 : index
    %4 = vector.load %arg6[%c0_5, %c0_6] : memref<128x8xbf16, #tpu.memory_space<vmem>>, vector<128x8xbf16>
    %cst_7 = arith.constant dense<0.000000e+00> : vector<512x8xf32>
    %5 = tpu.matmul %3, %4, %cst_7 {dimension_numbers = #tpu.dot_dimension_numbers<[1], [0], [0], [1], [0, 0, 1, 1], [], []>} : vector<512x128xbf16>, vector<128x8xbf16>, vector<512x8xf32> -> vector<512x8xf32>
    %6 = arith.addf %2, %5 : vector<512x8xf32>
    %c0_8 = arith.constant 0 : index
    %c0_9 = arith.constant 0 : index
    %7 = vector.load %arg4[%c0_8, %c0_9] : memref<1x8xf32, #tpu.memory_space<vmem>>, vector<1x8xf32>
    %8 = vector.broadcast %7 : vector<1x8xf32> to vector<512x8xf32>
    %9 = arith.addf %6, %8 : vector<512x8xf32>
    %cst_10 = arith.constant 0.000000e+00 : f32
    %10 = vector.broadcast %cst_10 : f32 to vector<512x8xf32>
    %11 = arith.maximumf %9, %10 : vector<512x8xf32>
    %c0_11 = arith.constant 0 : index
    %c0_12 = arith.constant 0 : index
    %12 = vector.load %arg7[%c0_11, %c0_12] : memref<512x8xf32, #tpu.memory_space<vmem>>, vector<512x8xf32>
    tpu.vector_store %arg7[%c0_11, %c0_12], %11 {strides = array<i32>} : memref<512x8xf32, #tpu.memory_space<vmem>>, vector<512x8xf32>,
    return
  }
  func.func @transform_0(%arg0: i32, %arg1: i32) -> (i32, i32) {
    %c0_i32 = arith.constant 0 : i32
    %c0_i32_0 = arith.constant 0 : i32
    return %arg0, %c0_i32 : i32, i32
  }
  func.func @transform_1(%arg0: i32, %arg1: i32) -> (i32, i32) {
    %c0_i32 = arith.constant 0 : i32
    %c0_i32_0 = arith.constant 0 : i32
    return %c0_i32, %arg1 : i32, i32
  }
  func.func @transform_2(%arg0: i32, %arg1: i32) -> (i32, i32) {
    %c0_i32 = arith.constant 0 : i32
    %c0_i32_0 = arith.constant 0 : i32
    return %c0_i32, %arg1 : i32, i32
  }
  func.func @transform_3(%arg0: i32, %arg1: i32) -> (i32, i32) {
    %c0_i32 = arith.constant 0 : i32
    %c0_i32_0 = arith.constant 0 : i32
    return %arg0, %c0_i32 : i32, i32
  }
  func.func @transform_4(%arg0: i32, %arg1: i32) -> (i32, i32) {
    %c0_i32 = arith.constant 0 : i32
    %c0_i32_0 = arith.constant 0 : i32
    return %c0_i32, %arg1 : i32, i32
  }
  func.func @transform_5(%arg0: i32, %arg1: i32) -> (i32, i32) {
    %c0_i32 = arith.constant 0 : i32
    return %arg0, %arg1 : i32, i32
  }
}

</mosaic_0001>

<llo_original>
// kernel: basic_block_forward.2
$region0: #{basic_block_forward.2}
  #allocation0 [shape = 'u32[]', space=smem, size = 0x4, offset = 0x4, fixed_abs, tag = 'smem constant byte address 0x4 - core index']
  #allocation1 [shape = 'u32[144,128]{1,0:T(1,128)}', space=vmem, size = 0x12000, scoped, tag = 'internal scratch']
  %s0 = inlined_call_operand.vmem [shape: bf16[512,128], index: 0, kind: input, shape index: {}]
  %s1 = inlined_call_operand.vmem [shape: bf16[128,8], index: 1, kind: input, shape index: {}]
  %s2 = inlined_call_operand.vmem [shape: f32[1,8], index: 2, kind: input, shape index: {}]
  %s3 = inlined_call_operand.vmem [shape: bf16[512,8], index: 3, kind: output, shape index: {}]
  %s4 = sld [smem:[#allocation0]]
  $region22: #{basic_block_forward.2} parent=0
    _
  %s6 = ssub.s32 1, %s4
  %s7 = scalar_select 0, %s6, %s4
  // Predicated region
  $region2: #{basic_block_forward.2} parent=0 // pred_check
    _
  $region3: #{basic_block_forward.2} parent=0 // pred_check_branch
    %9 = sbr.rel (0) target = $region5
  $region4: #{basic_block_forward.2} parent=0 // pred_region
    _
  $region5: #{basic_block_forward.2} parent=0 // pred_fallthru
    _
  // Predicated region
  $region6: #{basic_block_forward.2} parent=0 // pred_check
    _
  $region7: #{basic_block_forward.2} parent=0 // pred_check_branch
    %11 = sbr.rel (0) target = $region9
  $region8: #{basic_block_forward.2} parent=0 // pred_region
    _
  $region9: #{basic_block_forward.2} parent=0 // pred_fallthru
    _
  // Predicated region
  $region10: #{basic_block_forward.2} parent=0 // pred_check
    _
  $region11: #{basic_block_forward.2} parent=0 // pred_check_branch
    %13 = sbr.rel (0) target = $region13
  $region12: #{basic_block_forward.2} parent=0 // pred_region
    _
  $region13: #{basic_block_forward.2} parent=0 // pred_fallthru
    _
  %v15 = vld [vmem:[%s0] sm:$0xf]
  %v16 = vld [vmem:[%s0 + $0x4] sm:$0xf]
  %v17 = vld [vmem:[%s0 + $0x8] sm:$0xf]
  %v18 = vld [vmem:[%s0 + $0xc] sm:$0xf]
  %v19 = vld [vmem:[%s0 + $0x10] sm:$0xf]
  %v20 = vld [vmem:[%s0 + $0x14] sm:$0xf]
  %v21 = vld [vmem:[%s0 + $0x18] sm:$0xf]
  %v22 = vld [vmem:[%s0 + $0x1c] sm:$0xf]
  %v23 = vld [vmem:[%s0 + $0x20] sm:$0xf]
  %v24 = vld [vmem:[%s0 + $0x24] sm:$0xf]
  %v25 = vld [vmem:[%s0 + $0x28] sm:$0xf]
  %v26 = vld [vmem:[%s0 + $0x2c] sm:$0xf]
  %v27 = vld [vmem:[%s0 + $0x30] sm:$0xf]
  %v28 = vld [vmem:[%s0 + $0x34] sm:$0xf]
  %v29 = vld [vmem:[%s0 + $0x38] sm:$0xf]
  %v30 = vld [vmem:[%s0 + $0x3c] sm:$0xf]
  %v31 = vld [vmem:[%s0 + $0x40] sm:$0xf]
  %v32 = vld [vmem:[%s0 + $0x44] sm:$0xf]
  %v33 = vld [vmem:[%s0 + $0x48] sm:$0xf]
  %v34 = vld [vmem:[%s0 + $0x4c] sm:$0xf]
  %v35 = vld [vmem:[%s0 + $0x50] sm:$0xf]
  %v36 = vld [vmem:[%s0 + $0x54] sm:$0xf]
  %v37 = vld [vmem:[%s0 + $0x58] sm:$0xf]
  %v38 = vld [vmem:[%s0 + $0x5c] sm:$0xf]
  %v39 = vld [vmem:[%s0 + $0x60] sm:$0xf]
  %v40 = vld [vmem:[%s0 + $0x64] sm:$0xf]
  %v41 = vld [vmem:[%s0 + $0x68] sm:$0xf]
  %v42 = vld [vmem:[%s0 + $0x6c] sm:$0xf]
  %v43 = vld [vmem:[%s0 + $0x70] sm:$0xf]
  %v44 = vld [vmem:[%s0 + $0x74] sm:$0xf]
  %v45 = vld [vmem:[%s0 + $0x78] sm:$0xf]
  %v46 = vld [vmem:[%s0 + $0x7c] sm:$0xf]
  %v47 = vld [vmem:[%s0 + $0x80] sm:$0xf]
  %v48 = vld [vmem:[%s0 + $0x84] sm:$0xf]
  %v49 = vld [vmem:[%s0 + $0x88] sm:$0xf]
  %v50 = vld [vmem:[%s0 + $0x8c] sm:$0xf]
  %v51 = vld [vmem:[%s0 + $0x90] sm:$0xf]
  %v52 = vld [vmem:[%s0 + $0x94] sm:$0xf]
  %v53 = vld [vmem:[%s0 + $0x98] sm:$0xf]
  %v54 = vld [vmem:[%s0 + $0x9c] sm:$0xf]
  %v55 = vld [vmem:[%s0 + $0xa0] sm:$0xf]
  %v56 = vld [vmem:[%s0 + $0xa4] sm:$0xf]
  %v57 = vld [vmem:[%s0 + $0xa8] sm:$0xf]
  %v58 = vld [vmem:[%s0 + $0xac] sm:$0xf]
  %v59 = vld [vmem:[%s0 + $0xb0] sm:$0xf]
  %v60 = vld [vmem:[%s0 + $0xb4] sm:$0xf]
  %v61 = vld [vmem:[%s0 + $0xb8] sm:$0xf]
  %v62 = vld [vmem:[%s0 + $0xbc] sm:$0xf]
  %v63 = vld [vmem:[%s0 + $0xc0] sm:$0xf]
  %v64 = vld [vmem:[%s0 + $0xc4] sm:$0xf]
  %v65 = vld [vmem:[%s0 + $0xc8] sm:$0xf]
  %v66 = vld [vmem:[%s0 + $0xcc] sm:$0xf]
  %v67 = vld [vmem:[%s0 + $0xd0] sm:$0xf]
  %v68 = vld [vmem:[%s0 + $0xd4] sm:$0xf]
  %v69 = vld [vmem:[%s0 + $0xd8] sm:$0xf]
  %v70 = vld [vmem:[%s0 + $0xdc] sm:$0xf]
  %v71 = vld [vmem:[%s0 + $0xe0] sm:$0xf]
  %v72 = vld [vmem:[%s0 + $0xe4] sm:$0xf]
  %v73 = vld [vmem:[%s0 + $0xe8] sm:$0xf]
  %v74 = vld [vmem:[%s0 + $0xec] sm:$0xf]
  %v75 = vld [vmem:[%s0 + $0xf0] sm:$0xf]
  %v76 = vld [vmem:[%s0 + $0xf4] sm:$0xf]
  %v77 = vld [vmem:[%s0 + $0xf8] sm:$0xf]
  %v78 = vld [vmem:[%s0 + $0xfc] sm:$0xf]
  %v79 = vld [vmem:[%s1] sm:$0xf]
  %v80 = vld [vmem:[%s1 + $0x4] sm:$0xf]
  %v81 = vld [vmem:[%s1 + $0x8] sm:$0xf]
  %v82 = vld [vmem:[%s1 + $0xc] sm:$0xf]
  %v83 = vld [vmem:[%s1 + $0x10] sm:$0xf]
  %v84 = vld [vmem:[%s1 + $0x14] sm:$0xf]
  %v85 = vld [vmem:[%s1 + $0x18] sm:$0xf]
  %v86 = vld [vmem:[%s1 + $0x1c] sm:$0xf]
  %v87 = vld [vmem:[%s1 + $0x20] sm:$0xf]
  %v88 = vld [vmem:[%s1 + $0x24] sm:$0xf]
  %v89 = vld [vmem:[%s1 + $0x28] sm:$0xf]
  %v90 = vld [vmem:[%s1 + $0x2c] sm:$0xf]
  %v91 = vld [vmem:[%s1 + $0x30] sm:$0xf]
  %v92 = vld [vmem:[%s1 + $0x34] sm:$0xf]
  %v93 = vld [vmem:[%s1 + $0x38] sm:$0xf]
  %v94 = vld [vmem:[%s1 + $0x3c] sm:$0xf]
  %v95 = vld [vmem:[%s2] sm:$0x1]
  %v97 = vlaneseq
  %v98 = vshrl.u32 %v97, 7
  %v99 = vsub.s32 0, %v98
  %v100 = vrot.slane %v95, %v99
  %v166 = vunpack.c.l.b16 %v15
  %v167 = vunpack.c.l.b16 %v16
  %v168 = vunpack.c.l.b16 %v17
  %v169 = vunpack.c.l.b16 %v18
  %v170 = vunpack.c.l.b16 %v19
  %v171 = vunpack.c.l.b16 %v20
  %v172 = vunpack.c.l.b16 %v21
  %v173 = vunpack.c.l.b16 %v22
  %v174 = vunpack.c.l.b16 %v23
  %v175 = vunpack.c.l.b16 %v24
  %v176 = vunpack.c.l.b16 %v25
  %v177 = vunpack.c.l.b16 %v26
  %v178 = vunpack.c.l.b16 %v27
  %v179 = vunpack.c.l.b16 %v28
  %v180 = vunpack.c.l.b16 %v29
  %v181 = vunpack.c.l.b16 %v30
  %v182 = vunpack.c.l.b16 %v31
  %v183 = vunpack.c.l.b16 %v32
  %v184 = vunpack.c.l.b16 %v33
  %v185 = vunpack.c.l.b16 %v34
  %v186 = vunpack.c.l.b16 %v35
  %v187 = vunpack.c.l.b16 %v36
  %v188 = vunpack.c.l.b16 %v37
  %v189 = vunpack.c.l.b16 %v38
  %v190 = vunpack.c.l.b16 %v39
  %v191 = vunpack.c.l.b16 %v40
  %v192 = vunpack.c.l.b16 %v41
  %v193 = vunpack.c.l.b16 %v42
  %v194 = vunpack.c.l.b16 %v43
  %v195 = vunpack.c.l.b16 %v44
  %v196 = vunpack.c.l.b16 %v45
  %v197 = vunpack.c.l.b16 %v46
  %v198 = vunpack.c.l.b16 %v47
  %v199 = vunpack.c.l.b16 %v48
  %v200 = vunpack.c.l.b16 %v49
  %v201 = vunpack.c.l.b16 %v50
  %v202 = vunpack.c.l.b16 %v51
  %v203 = vunpack.c.l.b16 %v52
  %v204 = vunpack.c.l.b16 %v53
  %v205 = vunpack.c.l.b16 %v54
  %v206 = vunpack.c.l.b16 %v55
  %v207 = vunpack.c.l.b16 %v56
  %v208 = vunpack.c.l.b16 %v57
  %v209 = vunpack.c.l.b16 %v58
  %v210 = vunpack.c.l.b16 %v59
  %v211 = vunpack.c.l.b16 %v60
  %v212 = vunpack.c.l.b16 %v61
  %v213 = vunpack.c.l.b16 %v62
  %v214 = vunpack.c.l.b16 %v63
  %v215 = vunpack.c.l.b16 %v64
  %v216 = vunpack.c.l.b16 %v65
  %v217 = vunpack.c.l.b16 %v66
  %v218 = vunpack.c.l.b16 %v67
  %v219 = vunpack.c.l.b16 %v68
  %v220 = vunpack.c.l.b16 %v69
  %v221 = vunpack.c.l.b16 %v70
  %v222 = vunpack.c.l.b16 %v71
  %v223 = vunpack.c.l.b16 %v72
  %v224 = vunpack.c.l.b16 %v73
  %v225 = vunpack.c.l.b16 %v74
  %v226 = vunpack.c.l.b16 %v75
  %v227 = vunpack.c.l.b16 %v76
  %v228 = vunpack.c.l.b16 %v77
  %v229 = vunpack.c.l.b16 %v78
  %v230 = vpack.c.b16 %v167, %v166
  %v231 = vpack.c.b16 %v169, %v168
  %v232 = vpack.c.b16 %v171, %v170
  %v233 = vpack.c.b16 %v173, %v172
  %v234 = vpack.c.b16 %v175, %v174
  %v235 = vpack.c.b16 %v177, %v176
  %v236 = vpack.c.b16 %v179, %v178
  %v237 = vpack.c.b16 %v181, %v180
  %v238 = vpack.c.b16 %v183, %v182
  %v239 = vpack.c.b16 %v185, %v184
  %v240 = vpack.c.b16 %v187, %v186
  %v241 = vpack.c.b16 %v189, %v188
  %v242 = vpack.c.b16 %v191, %v190
  %v243 = vpack.c.b16 %v193, %v192
  %v244 = vpack.c.b16 %v195, %v194
  %v245 = vpack.c.b16 %v197, %v196
  %v246 = vpack.c.b16 %v199, %v198
  %v247 = vpack.c.b16 %v201, %v200
  %v248 = vpack.c.b16 %v203, %v202
  %v249 = vpack.c.b16 %v205, %v204
  %v250 = vpack.c.b16 %v207, %v206
  %v251 = vpack.c.b16 %v209, %v208
  %v252 = vpack.c.b16 %v211, %v210
  %v253 = vpack.c.b16 %v213, %v212
  %v254 = vpack.c.b16 %v215, %v214
  %v255 = vpack.c.b16 %v217, %v216
  %v256 = vpack.c.b16 %v219, %v218
  %v257 = vpack.c.b16 %v221, %v220
  %v258 = vpack.c.b16 %v223, %v222
  %v259 = vpack.c.b16 %v225, %v224
  %v260 = vpack.c.b16 %v227, %v226
  %v261 = vpack.c.b16 %v229, %v228
  %v310 = vunpack.c.l.b16 %v79
  %v311 = vunpack.c.l.b16 %v80
  %v312 = vunpack.c.l.b16 %v81
  %v313 = vunpack.c.l.b16 %v82
  %v314 = vunpack.c.l.b16 %v83
  %v315 = vunpack.c.l.b16 %v84
  %v316 = vunpack.c.l.b16 %v85
  %v317 = vunpack.c.l.b16 %v86
  %v318 = vunpack.c.l.b16 %v87
  %v319 = vunpack.c.l.b16 %v88
  %v320 = vunpack.c.l.b16 %v89
  %v321 = vunpack.c.l.b16 %v90
  %v322 = vunpack.c.l.b16 %v91
  %v323 = vunpack.c.l.b16 %v92
  %v324 = vunpack.c.l.b16 %v93
  %v325 = vunpack.c.l.b16 %v94
  %v326 = vpack.c.b16 %v311, %v310
  %v327 = vpack.c.b16 %v313, %v312
  %v328 = vpack.c.b16 %v315, %v314
  %v329 = vpack.c.b16 %v317, %v316
  %v330 = vpack.c.b16 %v319, %v318
  %v331 = vpack.c.b16 %v321, %v320
  %v332 = vpack.c.b16 %v323, %v322
  %v333 = vpack.c.b16 %v325, %v324
  %342 = vmatprep.subr.bf16.mxu0 0
  %343 = vmatpush1.bf16.msra.mxu0 %v326
  %344 = vmatprep.subr.bf16.mxu0 0
  %345 = vmatpush1.bf16.msra.mxu0 %v327
  %346 = vmatprep.subr.bf16.mxu0 0
  %347 = vmatpush1.bf16.msra.mxu0 %v328
  %348 = vmatprep.subr.bf16.mxu0 0
  %349 = vmatpush1.bf16.msra.mxu0 %v329
  %350 = vmatprep.subr.bf16.mxu0 0
  %351 = vmatpush1.bf16.msra.mxu0 %v330
  %352 = vmatprep.subr.bf16.mxu0 0
  %353 = vmatpush1.bf16.msra.mxu0 %v331
  %354 = vmatprep.subr.bf16.mxu0 0
  %355 = vmatpush1.bf16.msra.mxu0 %v332
  %356 = vmatprep.subr.bf16.mxu0 0
  %357 = vmatpush1.bf16.msra.mxu0 %v333
  %358 = vmatprep.subr.bf16.mxu0 0
  %359 = vmatpush1.bf16.msra.mxu0 0
  %360 = vmatprep.subr.bf16.mxu0 0
  %361 = vmatpush1.bf16.msra.mxu0 0
  %362 = vmatprep.subr.bf16.mxu0 0
  %363 = vmatpush1.bf16.msra.mxu0 0
  %364 = vmatprep.subr.bf16.mxu0 0
  %365 = vmatpush1.bf16.msra.mxu0 0
  %366 = vmatprep.subr.bf16.mxu0 0
  %367 = vmatpush1.bf16.msra.mxu0 0
  %368 = vmatprep.subr.bf16.mxu0 0
  %369 = vmatpush1.bf16.msra.mxu0 0
  %370 = vmatprep.subr.bf16.mxu0 0
  %371 = vmatpush1.bf16.msra.mxu0 0
  %372 = vmatprep.subr.bf16.mxu0 0
  %373 = vmatpush1.bf16.msra.mxu0 0
  %374 = vmatprep.mubr.bf16.mxu0 0
  %375 = vmatmul.mubr.bf16.gmra.mrb[0].mxu0 %v230
  %v376 = vpop.f32.mrb[0].mxu0
  %v377 = vadd.f32 %v100, %v376
  %v378 = vpop.f32.mrb[0].mxu0
  %v379 = vpop.f32.mrb[0].mxu0
  %v380 = vadd.f32 %v100, %v379
  %v381 = vpop.f32.mrb[0].mxu0
  %382 = vmatprep.mubr.bf16.mxu0 0
  %383 = vmatmul.mubr.bf16.gmra.mrb[0].mxu0 %v231
  %v384 = vpop.f32.mrb[0].mxu0
  %v385 = vadd.f32 %v100, %v384
  %v386 = vpop.f32.mrb[0].mxu0
  %v387 = vpop.f32.mrb[0].mxu0
  %v388 = vadd.f32 %v100, %v387
  %v389 = vpop.f32.mrb[0].mxu0
  %390 = vmatprep.mubr.bf16.mxu0 0
  %391 = vmatmul.mubr.bf16.gmra.mrb[0].mxu0 %v232
  %v392 = vpop.f32.mrb[0].mxu0
  %v393 = vadd.f32 %v100, %v392
  %v394 = vpop.f32.mrb[0].mxu0
  %v395 = vpop.f32.mrb[0].mxu0
  %v396 = vadd.f32 %v100, %v395
  %v397 = vpop.f32.mrb[0].mxu0
  %398 = vmatprep.mubr.bf16.mxu0 0
  %399 = vmatmul.mubr.bf16.gmra.mrb[0].mxu0 %v233
  %v400 = vpop.f32.mrb[0].mxu0
  %v401 = vadd.f32 %v100, %v400
  %v402 = vpop.f32.mrb[0].mxu0
  %v403 = vpop.f32.mrb[0].mxu0
  %v404 = vadd.f32 %v100, %v403
  %v405 = vpop.f32.mrb[0].mxu0
  %406 = vmatprep.mubr.bf16.mxu0 0
  %407 = vmatmul.mubr.bf16.gmra.mrb[0].mxu0 %v234
  %v408 = vpop.f32.mrb[0].mxu0
  %v409 = vadd.f32 %v100, %v408
  %v410 = vpop.f32.mrb[0].mxu0
  %v411 = vpop.f32.mrb[0].mxu0
  %v412 = vadd.f32 %v100, %v411
  %v413 = vpop.f32.mrb[0].mxu0
  %414 = vmatprep.mubr.bf16.mxu0 0
  %415 = vmatmul.mubr.bf16.gmra.mrb[0].mxu0 %v235
  %v416 = vpop.f32.mrb[0].mxu0
  %v417 = vadd.f32 %v100, %v416
  %v418 = vpop.f32.mrb[0].mxu0
  %v419 = vpop.f32.mrb[0].mxu0
  %v420 = vadd.f32 %v100, %v419
  %v421 = vpop.f32.mrb[0].mxu0
  %422 = vmatprep.mubr.bf16.mxu0 0
  %423 = vmatmul.mubr.bf16.gmra.mrb[0].mxu0 %v236
  %v424 = vpop.f32.mrb[0].mxu0
  %v425 = vadd.f32 %v100, %v424
  %v426 = vpop.f32.mrb[0].mxu0
  %v427 = vpop.f32.mrb[0].mxu0
  %v428 = vadd.f32 %v100, %v427
  %v429 = vpop.f32.mrb[0].mxu0
  %430 = vmatprep.mubr.bf16.mxu0 0
  %431 = vmatmul.mubr.bf16.gmra.mrb[0].mxu0 %v237
  %v432 = vpop.f32.mrb[0].mxu0
  %v433 = vadd.f32 %v100, %v432
  %v434 = vpop.f32.mrb[0].mxu0
  %v435 = vpop.f32.mrb[0].mxu0
  %v436 = vadd.f32 %v100, %v435
  %v437 = vpop.f32.mrb[0].mxu0
  %438 = vmatprep.mubr.bf16.mxu0 0
  %439 = vmatmul.mubr.bf16.gmra.mrb[0].mxu0 %v238
  %v440 = vpop.f32.mrb[0].mxu0
  %v441 = vadd.f32 %v100, %v440
  %v442 = vpop.f32.mrb[0].mxu0
  %v443 = vpop.f32.mrb[0].mxu0
  %v444 = vadd.f32 %v100, %v443
  %v445 = vpop.f32.mrb[0].mxu0
  %446 = vmatprep.mubr.bf16.mxu0 0
  %447 = vmatmul.mubr.bf16.gmra.mrb[0].mxu0 %v239
  %v448 = vpop.f32.mrb[0].mxu0
  %v449 = vadd.f32 %v100, %v448
  %v450 = vpop.f32.mrb[0].mxu0
  %v451 = vpop.f32.mrb[0].mxu0
  %v452 = vadd.f32 %v100, %v451
  %v453 = vpop.f32.mrb[0].mxu0
  %454 = vmatprep.mubr.bf16.mxu0 0
  %455 = vmatmul.mubr.bf16.gmra.mrb[0].mxu0 %v240
  %v456 = vpop.f32.mrb[0].mxu0
  %v457 = vadd.f32 %v100, %v456
  %v458 = vpop.f32.mrb[0].mxu0
  %v459 = vpop.f32.mrb[0].mxu0
  %v460 = vadd.f32 %v100, %v459
  %v461 = vpop.f32.mrb[0].mxu0
  %462 = vmatprep.mubr.bf16.mxu0 0
  %463 = vmatmul.mubr.bf16.gmra.mrb[0].mxu0 %v241
  %v464 = vpop.f32.mrb[0].mxu0
  %v465 = vadd.f32 %v100, %v464
  %v466 = vpop.f32.mrb[0].mxu0
  %v467 = vpop.f32.mrb[0].mxu0
  %v468 = vadd.f32 %v100, %v467
  %v469 = vpop.f32.mrb[0].mxu0
  %470 = vmatprep.mubr.bf16.mxu0 0
  %471 = vmatmul.mubr.bf16.gmra.mrb[0].mxu0 %v242
  %v472 = vpop.f32.mrb[0].mxu0
  %v473 = vadd.f32 %v100, %v472
  %v474 = vpop.f32.mrb[0].mxu0
  %v475 = vpop.f32.mrb[0].mxu0
  %v476 = vadd.f32 %v100, %v475
  %v477 = vpop.f32.mrb[0].mxu0
  %478 = vmatprep.mubr.bf16.mxu0 0
  %479 = vmatmul.mubr.bf16.gmra.mrb[0].mxu0 %v243
  %v480 = vpop.f32.mrb[0].mxu0
  %v481 = vadd.f32 %v100, %v480
  %v482 = vpop.f32.mrb[0].mxu0
  %v483 = vpop.f32.mrb[0].mxu0
  %v484 = vadd.f32 %v100, %v483
  %v485 = vpop.f32.mrb[0].mxu0
  %486 = vmatprep.mubr.bf16.mxu0 0
  %487 = vmatmul.mubr.bf16.gmra.mrb[0].mxu0 %v244
  %v488 = vpop.f32.mrb[0].mxu0
  %v489 = vadd.f32 %v100, %v488
  %v490 = vpop.f32.mrb[0].mxu0
  %v491 = vpop.f32.mrb[0].mxu0
  %v492 = vadd.f32 %v100, %v491
  %v493 = vpop.f32.mrb[0].mxu0
  %494 = vmatprep.mubr.bf16.mxu0 0
  %495 = vmatmul.mubr.bf16.gmra.mrb[0].mxu0 %v245
  %v496 = vpop.f32.mrb[0].mxu0
  %v497 = vadd.f32 %v100, %v496
  %v498 = vpop.f32.mrb[0].mxu0
  %v499 = vpop.f32.mrb[0].mxu0
  %v500 = vadd.f32 %v100, %v499
  %v501 = vpop.f32.mrb[0].mxu0
  %502 = vmatprep.mubr.bf16.mxu0 0
  %503 = vmatmul.mubr.bf16.gmra.mrb[0].mxu0 %v246
  %v504 = vpop.f32.mrb[0].mxu0
  %v505 = vadd.f32 %v100, %v504
  %v506 = vpop.f32.mrb[0].mxu0
  %v507 = vpop.f32.mrb[0].mxu0
  %v508 = vadd.f32 %v100, %v507
  %v509 = vpop.f32.mrb[0].mxu0
  %510 = vmatprep.mubr.bf16.mxu0 0
  %511 = vmatmul.mubr.bf16.gmra.mrb[0].mxu0 %v247
  %v512 = vpop.f32.mrb[0].mxu0
  %v513 = vadd.f32 %v100, %v512
  %v514 = vpop.f32.mrb[0].mxu0
  %v515 = vpop.f32.mrb[0].mxu0
  %v516 = vadd.f32 %v100, %v515
  %v517 = vpop.f32.mrb[0].mxu0
  %518 = vmatprep.mubr.bf16.mxu0 0
  %519 = vmatmul.mubr.bf16.gmra.mrb[0].mxu0 %v248
  %v520 = vpop.f32.mrb[0].mxu0
  %v521 = vadd.f32 %v100, %v520
  %v522 = vpop.f32.mrb[0].mxu0
  %v523 = vpop.f32.mrb[0].mxu0
  %v524 = vadd.f32 %v100, %v523
  %v525 = vpop.f32.mrb[0].mxu0
  %526 = vmatprep.mubr.bf16.mxu0 0
  %527 = vmatmul.mubr.bf16.gmra.mrb[0].mxu0 %v249
  %v528 = vpop.f32.mrb[0].mxu0
  %v529 = vadd.f32 %v100, %v528
  %v530 = vpop.f32.mrb[0].mxu0
  %v531 = vpop.f32.mrb[0].mxu0
  %v532 = vadd.f32 %v100, %v531
  %v533 = vpop.f32.mrb[0].mxu0
  %534 = vmatprep.mubr.bf16.mxu0 0
  %535 = vmatmul.mubr.bf16.gmra.mrb[0].mxu0 %v250
  %v536 = vpop.f32.mrb[0].mxu0
  %v537 = vadd.f32 %v100, %v536
  %v538 = vpop.f32.mrb[0].mxu0
  %v539 = vpop.f32.mrb[0].mxu0
  %v540 = vadd.f32 %v100, %v539
  %v541 = vpop.f32.mrb[0].mxu0
  %542 = vmatprep.mubr.bf16.mxu0 0
  %543 = vmatmul.mubr.bf16.gmra.mrb[0].mxu0 %v251
  %v544 = vpop.f32.mrb[0].mxu0
  %v545 = vadd.f32 %v100, %v544
  %v546 = vpop.f32.mrb[0].mxu0
  %v547 = vpop.f32.mrb[0].mxu0
  %v548 = vadd.f32 %v100, %v547
  %v549 = vpop.f32.mrb[0].mxu0
  %550 = vmatprep.mubr.bf16.mxu0 0
  %551 = vmatmul.mubr.bf16.gmra.mrb[0].mxu0 %v252
  %v552 = vpop.f32.mrb[0].mxu0
  %v553 = vadd.f32 %v100, %v552
  %v554 = vpop.f32.mrb[0].mxu0
  %v555 = vpop.f32.mrb[0].mxu0
  %v556 = vadd.f32 %v100, %v555
  %v557 = vpop.f32.mrb[0].mxu0
  %558 = vmatprep.mubr.bf16.mxu0 0
  %559 = vmatmul.mubr.bf16.gmra.mrb[0].mxu0 %v253
  %v560 = vpop.f32.mrb[0].mxu0
  %v561 = vadd.f32 %v100, %v560
  %v562 = vpop.f32.mrb[0].mxu0
  %v563 = vpop.f32.mrb[0].mxu0
  %v564 = vadd.f32 %v100, %v563
  %v565 = vpop.f32.mrb[0].mxu0
  %566 = vmatprep.mubr.bf16.mxu0 0
  %567 = vmatmul.mubr.bf16.gmra.mrb[0].mxu0 %v254
  %v568 = vpop.f32.mrb[0].mxu0
  %v569 = vadd.f32 %v100, %v568
  %v570 = vpop.f32.mrb[0].mxu0
  %v571 = vpop.f32.mrb[0].mxu0
  %v572 = vadd.f32 %v100, %v571
  %v573 = vpop.f32.mrb[0].mxu0
  %574 = vmatprep.mubr.bf16.mxu0 0
  %575 = vmatmul.mubr.bf16.gmra.mrb[0].mxu0 %v255
  %v576 = vpop.f32.mrb[0].mxu0
  %v577 = vadd.f32 %v100, %v576
  %v578 = vpop.f32.mrb[0].mxu0
  %v579 = vpop.f32.mrb[0].mxu0
  %v580 = vadd.f32 %v100, %v579
  %v581 = vpop.f32.mrb[0].mxu0
  %582 = vmatprep.mubr.bf16.mxu0 0
  %583 = vmatmul.mubr.bf16.gmra.mrb[0].mxu0 %v256
  %v584 = vpop.f32.mrb[0].mxu0
  %v585 = vadd.f32 %v100, %v584
  %v586 = vpop.f32.mrb[0].mxu0
  %v587 = vpop.f32.mrb[0].mxu0
  %v588 = vadd.f32 %v100, %v587
  %v589 = vpop.f32.mrb[0].mxu0
  %590 = vmatprep.mubr.bf16.mxu0 0
  %591 = vmatmul.mubr.bf16.gmra.mrb[0].mxu0 %v257
  %v592 = vpop.f32.mrb[0].mxu0
  %v593 = vadd.f32 %v100, %v592
  %v594 = vpop.f32.mrb[0].mxu0
  %v595 = vpop.f32.mrb[0].mxu0
  %v596 = vadd.f32 %v100, %v595
  %v597 = vpop.f32.mrb[0].mxu0
  %598 = vmatprep.mubr.bf16.mxu0 0
  %599 = vmatmul.mubr.bf16.gmra.mrb[0].mxu0 %v258
  %v600 = vpop.f32.mrb[0].mxu0
  %v601 = vadd.f32 %v100, %v600
  %v602 = vpop.f32.mrb[0].mxu0
  %v603 = vpop.f32.mrb[0].mxu0
  %v604 = vadd.f32 %v100, %v603
  %v605 = vpop.f32.mrb[0].mxu0
  %606 = vmatprep.mubr.bf16.mxu0 0
  %607 = vmatmul.mubr.bf16.gmra.mrb[0].mxu0 %v259
  %v608 = vpop.f32.mrb[0].mxu0
  %v609 = vadd.f32 %v100, %v608
  %v610 = vpop.f32.mrb[0].mxu0
  %v611 = vpop.f32.mrb[0].mxu0
  %v612 = vadd.f32 %v100, %v611
  %v613 = vpop.f32.mrb[0].mxu0
  %614 = vmatprep.mubr.bf16.mxu0 0
  %615 = vmatmul.mubr.bf16.gmra.mrb[0].mxu0 %v260
  %v616 = vpop.f32.mrb[0].mxu0
  %v617 = vadd.f32 %v100, %v616
  %v618 = vpop.f32.mrb[0].mxu0
  %v619 = vpop.f32.mrb[0].mxu0
  %v620 = vadd.f32 %v100, %v619
  %v621 = vpop.f32.mrb[0].mxu0
  %622 = vmatprep.mubr.bf16.mxu0 0
  %623 = vmatmul.mubr.bf16.gmra.mrb[0].mxu0 %v261
  %v624 = vpop.f32.mrb[0].mxu0
  %v625 = vadd.f32 %v100, %v624
  %v626 = vpop.f32.mrb[0].mxu0
  %v627 = vpop.f32.mrb[0].mxu0
  %v628 = vadd.f32 %v100, %v627
  %v629 = vpop.f32.mrb[0].mxu0
  %630 = vdwg.mxu0
  %v631 = vmax.f32 %v377, 0.0
  %v632 = vmax.f32 %v380, 0.0
  %v633 = vmax.f32 %v385, 0.0
  %v634 = vmax.f32 %v388, 0.0
  %v635 = vmax.f32 %v393, 0.0
  %v636 = vmax.f32 %v396, 0.0
  %v637 = vmax.f32 %v401, 0.0
  %v638 = vmax.f32 %v404, 0.0
  %v639 = vmax.f32 %v409, 0.0
  %v640 = vmax.f32 %v412, 0.0
  %v641 = vmax.f32 %v417, 0.0
  %v642 = vmax.f32 %v420, 0.0
  %v643 = vmax.f32 %v425, 0.0
  %v644 = vmax.f32 %v428, 0.0
  %v645 = vmax.f32 %v433, 0.0
  %v646 = vmax.f32 %v436, 0.0
  %v647 = vmax.f32 %v441, 0.0
  %v648 = vmax.f32 %v444, 0.0
  %v649 = vmax.f32 %v449, 0.0
  %v650 = vmax.f32 %v452, 0.0
  %v651 = vmax.f32 %v457, 0.0
  %v652 = vmax.f32 %v460, 0.0
  %v653 = vmax.f32 %v465, 0.0
  %v654 = vmax.f32 %v468, 0.0
  %v655 = vmax.f32 %v473, 0.0
  %v656 = vmax.f32 %v476, 0.0
  %v657 = vmax.f32 %v481, 0.0
  %v658 = vmax.f32 %v484, 0.0
  %v659 = vmax.f32 %v489, 0.0
  %v660 = vmax.f32 %v492, 0.0
  %v661 = vmax.f32 %v497, 0.0
  %v662 = vmax.f32 %v500, 0.0
  %v663 = vmax.f32 %v505, 0.0
  %v664 = vmax.f32 %v508, 0.0
  %v665 = vmax.f32 %v513, 0.0
  %v666 = vmax.f32 %v516, 0.0
  %v667 = vmax.f32 %v521, 0.0
  %v668 = vmax.f32 %v524, 0.0
  %v669 = vmax.f32 %v529, 0.0
  %v670 = vmax.f32 %v532, 0.0
  %v671 = vmax.f32 %v537, 0.0
  %v672 = vmax.f32 %v540, 0.0
  %v673 = vmax.f32 %v545, 0.0
  %v674 = vmax.f32 %v548, 0.0
  %v675 = vmax.f32 %v553, 0.0
  %v676 = vmax.f32 %v556, 0.0
  %v677 = vmax.f32 %v561, 0.0
  %v678 = vmax.f32 %v564, 0.0
  %v679 = vmax.f32 %v569, 0.0
  %v680 = vmax.f32 %v572, 0.0
  %v681 = vmax.f32 %v577, 0.0
  %v682 = vmax.f32 %v580, 0.0
  %v683 = vmax.f32 %v585, 0.0
  %v684 = vmax.f32 %v588, 0.0
  %v685 = vmax.f32 %v593, 0.0
  %v686 = vmax.f32 %v596, 0.0
  %v687 = vmax.f32 %v601, 0.0
  %v688 = vmax.f32 %v604, 0.0
  %v689 = vmax.f32 %v609, 0.0
  %v690 = vmax.f32 %v612, 0.0
  %v691 = vmax.f32 %v617, 0.0
  %v692 = vmax.f32 %v620, 0.0
  %v693 = vmax.f32 %v625, 0.0
  %v694 = vmax.f32 %v628, 0.0
  %v695 = vpack.c.bf16 %v632, %v631
  %v696 = vpack.c.bf16 %v634, %v633
  %v697 = vpack.c.bf16 %v636, %v635
  %v698 = vpack.c.bf16 %v638, %v637
  %v699 = vpack.c.bf16 %v640, %v639
  %v700 = vpack.c.bf16 %v642, %v641
  %v701 = vpack.c.bf16 %v644, %v643
  %v702 = vpack.c.bf16 %v646, %v645
  %v703 = vpack.c.bf16 %v648, %v647
  %v704 = vpack.c.bf16 %v650, %v649
  %v705 = vpack.c.bf16 %v652, %v651
  %v706 = vpack.c.bf16 %v654, %v653
  %v707 = vpack.c.bf16 %v656, %v655
  %v708 = vpack.c.bf16 %v658, %v657
  %v709 = vpack.c.bf16 %v660, %v659
  %v710 = vpack.c.bf16 %v662, %v661
  %v711 = vpack.c.bf16 %v664, %v663
  %v712 = vpack.c.bf16 %v666, %v665
  %v713 = vpack.c.bf16 %v668, %v667
  %v714 = vpack.c.bf16 %v670, %v669
  %v715 = vpack.c.bf16 %v672, %v671
  %v716 = vpack.c.bf16 %v674, %v673
  %v717 = vpack.c.bf16 %v676, %v675
  %v718 = vpack.c.bf16 %v678, %v677
  %v719 = vpack.c.bf16 %v680, %v679
  %v720 = vpack.c.bf16 %v682, %v681
  %v721 = vpack.c.bf16 %v684, %v683
  %v722 = vpack.c.bf16 %v686, %v685
  %v723 = vpack.c.bf16 %v688, %v687
  %v724 = vpack.c.bf16 %v690, %v689
  %v725 = vpack.c.bf16 %v692, %v691
  %v726 = vpack.c.bf16 %v694, %v693
  %v759 = vunpack.c.l.b16 %v695
  %v760 = vunpack.c.h.b16 %v695
  %v761 = vunpack.c.l.b16 %v696
  %v762 = vunpack.c.h.b16 %v696
  %v763 = vunpack.c.l.b16 %v697
  %v764 = vunpack.c.h.b16 %v697
  %v765 = vunpack.c.l.b16 %v698
  %v766 = vunpack.c.h.b16 %v698
  %v767 = vunpack.c.l.b16 %v699
  %v768 = vunpack.c.h.b16 %v699
  %v769 = vunpack.c.l.b16 %v700
  %v770 = vunpack.c.h.b16 %v700
  %v771 = vunpack.c.l.b16 %v701
  %v772 = vunpack.c.h.b16 %v701
  %v773 = vunpack.c.l.b16 %v702
  %v774 = vunpack.c.h.b16 %v702
  %v775 = vunpack.c.l.b16 %v703
  %v776 = vunpack.c.h.b16 %v703
  %v777 = vunpack.c.l.b16 %v704
  %v778 = vunpack.c.h.b16 %v704
  %v779 = vunpack.c.l.b16 %v705
  %v780 = vunpack.c.h.b16 %v705
  %v781 = vunpack.c.l.b16 %v706
  %v782 = vunpack.c.h.b16 %v706
  %v783 = vunpack.c.l.b16 %v707
  %v784 = vunpack.c.h.b16 %v707
  %v785 = vunpack.c.l.b16 %v708
  %v786 = vunpack.c.h.b16 %v708
  %v787 = vunpack.c.l.b16 %v709
  %v788 = vunpack.c.h.b16 %v709
  %v789 = vunpack.c.l.b16 %v710
  %v790 = vunpack.c.h.b16 %v710
  %v791 = vunpack.c.l.b16 %v711
  %v792 = vunpack.c.h.b16 %v711
  %v793 = vunpack.c.l.b16 %v712
  %v794 = vunpack.c.h.b16 %v712
  %v795 = vunpack.c.l.b16 %v713
  %v796 = vunpack.c.h.b16 %v713
  %v797 = vunpack.c.l.b16 %v714
  %v798 = vunpack.c.h.b16 %v714
  %v799 = vunpack.c.l.b16 %v715
  %v800 = vunpack.c.h.b16 %v715
  %v801 = vunpack.c.l.b16 %v716
  %v802 = vunpack.c.h.b16 %v716
  %v803 = vunpack.c.l.b16 %v717
  %v804 = vunpack.c.h.b16 %v717
  %v805 = vunpack.c.l.b16 %v718
  %v806 = vunpack.c.h.b16 %v718
  %v807 = vunpack.c.l.b16 %v719
  %v808 = vunpack.c.h.b16 %v719
  %v809 = vunpack.c.l.b16 %v720
  %v810 = vunpack.c.h.b16 %v720
  %v811 = vunpack.c.l.b16 %v721
  %v812 = vunpack.c.h.b16 %v721
  %v813 = vunpack.c.l.b16 %v722
  %v814 = vunpack.c.h.b16 %v722
  %v815 = vunpack.c.l.b16 %v723
  %v816 = vunpack.c.h.b16 %v723
  %v817 = vunpack.c.l.b16 %v724
  %v818 = vunpack.c.h.b16 %v724
  %v819 = vunpack.c.l.b16 %v725
  %v820 = vunpack.c.h.b16 %v725
  %v821 = vunpack.c.l.b16 %v726
  %v822 = vunpack.c.h.b16 %v726
  %v823 = vpack.c.b16 %v759, %v759
  %v824 = vpack.c.b16 %v760, %v760
  %v825 = vpack.c.b16 %v761, %v761
  %v826 = vpack.c.b16 %v762, %v762
  %v827 = vpack.c.b16 %v763, %v763
  %v828 = vpack.c.b16 %v764, %v764
  %v829 = vpack.c.b16 %v765, %v765
  %v830 = vpack.c.b16 %v766, %v766
  %v831 = vpack.c.b16 %v767, %v767
  %v832 = vpack.c.b16 %v768, %v768
  %v833 = vpack.c.b16 %v769, %v769
  %v834 = vpack.c.b16 %v770, %v770
  %v835 = vpack.c.b16 %v771, %v771
  %v836 = vpack.c.b16 %v772, %v772
  %v837 = vpack.c.b16 %v773, %v773
  %v838 = vpack.c.b16 %v774, %v774
  %v839 = vpack.c.b16 %v775, %v775
  %v840 = vpack.c.b16 %v776, %v776
  %v841 = vpack.c.b16 %v777, %v777
  %v842 = vpack.c.b16 %v778, %v778
  %v843 = vpack.c.b16 %v779, %v779
  %v844 = vpack.c.b16 %v780, %v780
  %v845 = vpack.c.b16 %v781, %v781
  %v846 = vpack.c.b16 %v782, %v782
  %v847 = vpack.c.b16 %v783, %v783
  %v848 = vpack.c.b16 %v784, %v784
  %v849 = vpack.c.b16 %v785, %v785
  %v850 = vpack.c.b16 %v786, %v786
  %v851 = vpack.c.b16 %v787, %v787
  %v852 = vpack.c.b16 %v788, %v788
  %v853 = vpack.c.b16 %v789, %v789
  %v854 = vpack.c.b16 %v790, %v790
  %v855 = vpack.c.b16 %v791, %v791
  %v856 = vpack.c.b16 %v792, %v792
  %v857 = vpack.c.b16 %v793, %v793
  %v858 = vpack.c.b16 %v794, %v794
  %v859 = vpack.c.b16 %v795, %v795
  %v860 = vpack.c.b16 %v796, %v796
  %v861 = vpack.c.b16 %v797, %v797
  %v862 = vpack.c.b16 %v798, %v798
  %v863 = vpack.c.b16 %v799, %v799
  %v864 = vpack.c.b16 %v800, %v800
  %v865 = vpack.c.b16 %v801, %v801
  %v866 = vpack.c.b16 %v802, %v802
  %v867 = vpack.c.b16 %v803, %v803
  %v868 = vpack.c.b16 %v804, %v804
  %v869 = vpack.c.b16 %v805, %v805
  %v870 = vpack.c.b16 %v806, %v806
  %v871 = vpack.c.b16 %v807, %v807
  %v872 = vpack.c.b16 %v808, %v808
  %v873 = vpack.c.b16 %v809, %v809
  %v874 = vpack.c.b16 %v810, %v810
  %v875 = vpack.c.b16 %v811, %v811
  %v876 = vpack.c.b16 %v812, %v812
  %v877 = vpack.c.b16 %v813, %v813
  %v878 = vpack.c.b16 %v814, %v814
  %v879 = vpack.c.b16 %v815, %v815
  %v880 = vpack.c.b16 %v816, %v816
  %v881 = vpack.c.b16 %v817, %v817
  %v882 = vpack.c.b16 %v818, %v818
  %v883 = vpack.c.b16 %v819, %v819
  %v884 = vpack.c.b16 %v820, %v820
  %v885 = vpack.c.b16 %v821, %v821
  %v886 = vpack.c.b16 %v822, %v822
  %vm951 = vcmask 60416
  %952 = vst.msk [vmem:[%s3] sm:$0xf] %vm951, %v823
  %953 = vst.msk [vmem:[%s3 + $0x4] sm:$0xf] %vm951, %v824
  %954 = vst.msk [vmem:[%s3 + $0x8] sm:$0xf] %vm951, %v825
  %955 = vst.msk [vmem:[%s3 + $0xc] sm:$0xf] %vm951, %v826
  %956 = vst.msk [vmem:[%s3 + $0x10] sm:$0xf] %vm951, %v827
  %957 = vst.msk [vmem:[%s3 + $0x14] sm:$0xf] %vm951, %v828
  %958 = vst.msk [vmem:[%s3 + $0x18] sm:$0xf] %vm951, %v829
  %959 = vst.msk [vmem:[%s3 + $0x1c] sm:$0xf] %vm951, %v830
  %960 = vst.msk [vmem:[%s3 + $0x20] sm:$0xf] %vm951, %v831
  %961 = vst.msk [vmem:[%s3 + $0x24] sm:$0xf] %vm951, %v832
  %962 = vst.msk [vmem:[%s3 + $0x28] sm:$0xf] %vm951, %v833
  %963 = vst.msk [vmem:[%s3 + $0x2c] sm:$0xf] %vm951, %v834
  %964 = vst.msk [vmem:[%s3 + $0x30] sm:$0xf] %vm951, %v835
  %965 = vst.msk [vmem:[%s3 + $0x34] sm:$0xf] %vm951, %v836
  %966 = vst.msk [vmem:[%s3 + $0x38] sm:$0xf] %vm951, %v837
  %967 = vst.msk [vmem:[%s3 + $0x3c] sm:$0xf] %vm951, %v838
  %968 = vst.msk [vmem:[%s3 + $0x40] sm:$0xf] %vm951, %v839
  %969 = vst.msk [vmem:[%s3 + $0x44] sm:$0xf] %vm951, %v840
  %970 = vst.msk [vmem:[%s3 + $0x48] sm:$0xf] %vm951, %v841
  %971 = vst.msk [vmem:[%s3 + $0x4c] sm:$0xf] %vm951, %v842
  %972 = vst.msk [vmem:[%s3 + $0x50] sm:$0xf] %vm951, %v843
  %973 = vst.msk [vmem:[%s3 + $0x54] sm:$0xf] %vm951, %v844
  %974 = vst.msk [vmem:[%s3 + $0x58] sm:$0xf] %vm951, %v845
  %975 = vst.msk [vmem:[%s3 + $0x5c] sm:$0xf] %vm951, %v846
  %976 = vst.msk [vmem:[%s3 + $0x60] sm:$0xf] %vm951, %v847
  %977 = vst.msk [vmem:[%s3 + $0x64] sm:$0xf] %vm951, %v848
  %978 = vst.msk [vmem:[%s3 + $0x68] sm:$0xf] %vm951, %v849
  %979 = vst.msk [vmem:[%s3 + $0x6c] sm:$0xf] %vm951, %v850
  %980 = vst.msk [vmem:[%s3 + $0x70] sm:$0xf] %vm951, %v851
  %981 = vst.msk [vmem:[%s3 + $0x74] sm:$0xf] %vm951, %v852
  %982 = vst.msk [vmem:[%s3 + $0x78] sm:$0xf] %vm951, %v853
  %983 = vst.msk [vmem:[%s3 + $0x7c] sm:$0xf] %vm951, %v854
  %984 = vst.msk [vmem:[%s3 + $0x80] sm:$0xf] %vm951, %v855
  %985 = vst.msk [vmem:[%s3 + $0x84] sm:$0xf] %vm951, %v856
  %986 = vst.msk [vmem:[%s3 + $0x88] sm:$0xf] %vm951, %v857
  %987 = vst.msk [vmem:[%s3 + $0x8c] sm:$0xf] %vm951, %v858
  %988 = vst.msk [vmem:[%s3 + $0x90] sm:$0xf] %vm951, %v859
  %989 = vst.msk [vmem:[%s3 + $0x94] sm:$0xf] %vm951, %v860
  %990 = vst.msk [vmem:[%s3 + $0x98] sm:$0xf] %vm951, %v861
  %991 = vst.msk [vmem:[%s3 + $0x9c] sm:$0xf] %vm951, %v862
  %992 = vst.msk [vmem:[%s3 + $0xa0] sm:$0xf] %vm951, %v863
  %993 = vst.msk [vmem:[%s3 + $0xa4] sm:$0xf] %vm951, %v864
  %994 = vst.msk [vmem:[%s3 + $0xa8] sm:$0xf] %vm951, %v865
  %995 = vst.msk [vmem:[%s3 + $0xac] sm:$0xf] %vm951, %v866
  %996 = vst.msk [vmem:[%s3 + $0xb0] sm:$0xf] %vm951, %v867
  %997 = vst.msk [vmem:[%s3 + $0xb4] sm:$0xf] %vm951, %v868
  %998 = vst.msk [vmem:[%s3 + $0xb8] sm:$0xf] %vm951, %v869
  %999 = vst.msk [vmem:[%s3 + $0xbc] sm:$0xf] %vm951, %v870
  %1000 = vst.msk [vmem:[%s3 + $0xc0] sm:$0xf] %vm951, %v871
  %1001 = vst.msk [vmem:[%s3 + $0xc4] sm:$0xf] %vm951, %v872
  %1002 = vst.msk [vmem:[%s3 + $0xc8] sm:$0xf] %vm951, %v873
  %1003 = vst.msk [vmem:[%s3 + $0xcc] sm:$0xf] %vm951, %v874
  %1004 = vst.msk [vmem:[%s3 + $0xd0] sm:$0xf] %vm951, %v875
  %1005 = vst.msk [vmem:[%s3 + $0xd4] sm:$0xf] %vm951, %v876
  %1006 = vst.msk [vmem:[%s3 + $0xd8] sm:$0xf] %vm951, %v877
  %1007 = vst.msk [vmem:[%s3 + $0xdc] sm:$0xf] %vm951, %v878
  %1008 = vst.msk [vmem:[%s3 + $0xe0] sm:$0xf] %vm951, %v879
  %1009 = vst.msk [vmem:[%s3 + $0xe4] sm:$0xf] %vm951, %v880
  %1010 = vst.msk [vmem:[%s3 + $0xe8] sm:$0xf] %vm951, %v881
  %1011 = vst.msk [vmem:[%s3 + $0xec] sm:$0xf] %vm951, %v882
  %1012 = vst.msk [vmem:[%s3 + $0xf0] sm:$0xf] %vm951, %v883
  %1013 = vst.msk [vmem:[%s3 + $0xf4] sm:$0xf] %vm951, %v884
  %1014 = vst.msk [vmem:[%s3 + $0xf8] sm:$0xf] %vm951, %v885
  %1015 = vst.msk [vmem:[%s3 + $0xfc] sm:$0xf] %vm951, %v886
  // Predicated region
  $region14: #{basic_block_forward.2} parent=0 // pred_check
    _
  $region15: #{basic_block_forward.2} parent=0 // pred_check_branch
    %1017 = sbr.rel (0) target = $region17
  $region16: #{basic_block_forward.2} parent=0 // pred_region
    _
  $region17: #{basic_block_forward.2} parent=0 // pred_fallthru
    _
  // Predicated region
  $region18: #{basic_block_forward.2} parent=0 // pred_check
    _
  $region19: #{basic_block_forward.2} parent=0 // pred_check_branch
    %1019 = sbr.rel (0) target = $region21
  $region20: #{basic_block_forward.2} parent=0 // pred_region
    _
  $region21: #{basic_block_forward.2} parent=0 // pred_fallthru
    _

// kernel: basic_block_forward.3
$region0: #{basic_block_forward.3}
  #allocation0 [shape = 'u32[]', space=smem, size = 0x4, offset = 0x4, fixed_abs, tag = 'smem constant byte address 0x4 - core index']
  #allocation1 [shape = 'u32[144,128]{1,0:T(1,128)}', space=vmem, size = 0x12000, scoped, tag = 'internal scratch']
  %s0 = inlined_call_operand.vmem [shape: bf16[512,128], index: 0, kind: input, shape index: {}]
  %s1 = inlined_call_operand.vmem [shape: bf16[128,8], index: 1, kind: input, shape index: {}]
  %s2 = inlined_call_operand.vmem [shape: f32[1,8], index: 2, kind: input, shape index: {}]
  %s3 = inlined_call_operand.vmem [shape: bf16[512,128], index: 3, kind: input, shape index: {}]
  %s4 = inlined_call_operand.vmem [shape: bf16[128,8], index: 4, kind: input, shape index: {}]
  %s5 = inlined_call_operand.vmem [shape: f32[512,8], index: 5, kind: output, shape index: {}]
  %s6 = sld [smem:[#allocation0]]
  $region30: #{basic_block_forward.3} parent=0
    _
  %s8 = ssub.s32 1, %s6
  %s9 = scalar_select 0, %s8, %s6
  // Predicated region
  $region2: #{basic_block_forward.3} parent=0 // pred_check
    _
  $region3: #{basic_block_forward.3} parent=0 // pred_check_branch
    %11 = sbr.rel (0) target = $region5
  $region4: #{basic_block_forward.3} parent=0 // pred_region
    _
  $region5: #{basic_block_forward.3} parent=0 // pred_fallthru
    _
  // Predicated region
  $region6: #{basic_block_forward.3} parent=0 // pred_check
    _
  $region7: #{basic_block_forward.3} parent=0 // pred_check_branch
    %13 = sbr.rel (0) target = $region9
  $region8: #{basic_block_forward.3} parent=0 // pred_region
    _
  $region9: #{basic_block_forward.3} parent=0 // pred_fallthru
    _
  // Predicated region
  $region10: #{basic_block_forward.3} parent=0 // pred_check
    _
  $region11: #{basic_block_forward.3} parent=0 // pred_check_branch
    %15 = sbr.rel (0) target = $region13
  $region12: #{basic_block_forward.3} parent=0 // pred_region
    _
  $region13: #{basic_block_forward.3} parent=0 // pred_fallthru
    _
  // Predicated region
  $region14: #{basic_block_forward.3} parent=0 // pred_check
    _
  $region15: #{basic_block_forward.3} parent=0 // pred_check_branch
    %17 = sbr.rel (0) target = $region17
  $region16: #{basic_block_forward.3} parent=0 // pred_region
    _
  $region17: #{basic_block_forward.3} parent=0 // pred_fallthru
    _
  // Predicated region
  $region18: #{basic_block_forward.3} parent=0 // pred_check
    _
  $region19: #{basic_block_forward.3} parent=0 // pred_check_branch
    %19 = sbr.rel (0) target = $region21
  $region20: #{basic_block_forward.3} parent=0 // pred_region
    _
  $region21: #{basic_block_forward.3} parent=0 // pred_fallthru
    _
  %v21 = vld [vmem:[%s0] sm:$0xf]
  %v22 = vld [vmem:[%s0 + $0x4] sm:$0xf]
  %v23 = vld [vmem:[%s0 + $0x8] sm:$0xf]
  %v24 = vld [vmem:[%s0 + $0xc] sm:$0xf]
  %v25 = vld [vmem:[%s0 + $0x10] sm:$0xf]
  %v26 = vld [vmem:[%s0 + $0x14] sm:$0xf]
  %v27 = vld [vmem:[%s0 + $0x18] sm:$0xf]
  %v28 = vld [vmem:[%s0 + $0x1c] sm:$0xf]
  %v29 = vld [vmem:[%s0 + $0x20] sm:$0xf]
  %v30 = vld [vmem:[%s0 + $0x24] sm:$0xf]
  %v31 = vld [vmem:[%s0 + $0x28] sm:$0xf]
  %v32 = vld [vmem:[%s0 + $0x2c] sm:$0xf]
  %v33 = vld [vmem:[%s0 + $0x30] sm:$0xf]
  %v34 = vld [vmem:[%s0 + $0x34] sm:$0xf]
  %v35 = vld [vmem:[%s0 + $0x38] sm:$0xf]
  %v36 = vld [vmem:[%s0 + $0x3c] sm:$0xf]
  %v37 = vld [vmem:[%s0 + $0x40] sm:$0xf]
  %v38 = vld [vmem:[%s0 + $0x44] sm:$0xf]
  %v39 = vld [vmem:[%s0 + $0x48] sm:$0xf]
  %v40 = vld [vmem:[%s0 + $0x4c] sm:$0xf]
  %v41 = vld [vmem:[%s0 + $0x50] sm:$0xf]
  %v42 = vld [vmem:[%s0 + $0x54] sm:$0xf]
  %v43 = vld [vmem:[%s0 + $0x58] sm:$0xf]
  %v44 = vld [vmem:[%s0 + $0x5c] sm:$0xf]
  %v45 = vld [vmem:[%s0 + $0x60] sm:$0xf]
  %v46 = vld [vmem:[%s0 + $0x64] sm:$0xf]
  %v47 = vld [vmem:[%s0 + $0x68] sm:$0xf]
  %v48 = vld [vmem:[%s0 + $0x6c] sm:$0xf]
  %v49 = vld [vmem:[%s0 + $0x70] sm:$0xf]
  %v50 = vld [vmem:[%s0 + $0x74] sm:$0xf]
  %v51 = vld [vmem:[%s0 + $0x78] sm:$0xf]
  %v52 = vld [vmem:[%s0 + $0x7c] sm:$0xf]
  %v53 = vld [vmem:[%s0 + $0x80] sm:$0xf]
  %v54 = vld [vmem:[%s0 + $0x84] sm:$0xf]
  %v55 = vld [vmem:[%s0 + $0x88] sm:$0xf]
  %v56 = vld [vmem:[%s0 + $0x8c] sm:$0xf]
  %v57 = vld [vmem:[%s0 + $0x90] sm:$0xf]
  %v58 = vld [vmem:[%s0 + $0x94] sm:$0xf]
  %v59 = vld [vmem:[%s0 + $0x98] sm:$0xf]
  %v60 = vld [vmem:[%s0 + $0x9c] sm:$0xf]
  %v61 = vld [vmem:[%s0 + $0xa0] sm:$0xf]
  %v62 = vld [vmem:[%s0 + $0xa4] sm:$0xf]
  %v63 = vld [vmem:[%s0 + $0xa8] sm:$0xf]
  %v64 = vld [vmem:[%s0 + $0xac] sm:$0xf]
  %v65 = vld [vmem:[%s0 + $0xb0] sm:$0xf]
  %v66 = vld [vmem:[%s0 + $0xb4] sm:$0xf]
  %v67 = vld [vmem:[%s0 + $0xb8] sm:$0xf]
  %v68 = vld [vmem:[%s0 + $0xbc] sm:$0xf]
  %v69 = vld [vmem:[%s0 + $0xc0] sm:$0xf]
  %v70 = vld [vmem:[%s0 + $0xc4] sm:$0xf]
  %v71 = vld [vmem:[%s0 + $0xc8] sm:$0xf]
  %v72 = vld [vmem:[%s0 + $0xcc] sm:$0xf]
  %v73 = vld [vmem:[%s0 + $0xd0] sm:$0xf]
  %v74 = vld [vmem:[%s0 + $0xd4] sm:$0xf]
  %v75 = vld [vmem:[%s0 + $0xd8] sm:$0xf]
  %v76 = vld [vmem:[%s0 + $0xdc] sm:$0xf]
  %v77 = vld [vmem:[%s0 + $0xe0] sm:$0xf]
  %v78 = vld [vmem:[%s0 + $0xe4] sm:$0xf]
  %v79 = vld [vmem:[%s0 + $0xe8] sm:$0xf]
  %v80 = vld [vmem:[%s0 + $0xec] sm:$0xf]
  %v81 = vld [vmem:[%s0 + $0xf0] sm:$0xf]
  %v82 = vld [vmem:[%s0 + $0xf4] sm:$0xf]
  %v83 = vld [vmem:[%s0 + $0xf8] sm:$0xf]
  %v84 = vld [vmem:[%s0 + $0xfc] sm:$0xf]
  %v85 = vld [vmem:[%s1] sm:$0xf]
  %v86 = vld [vmem:[%s1 + $0x4] sm:$0xf]
  %v87 = vld [vmem:[%s1 + $0x8] sm:$0xf]
  %v88 = vld [vmem:[%s1 + $0xc] sm:$0xf]
  %v89 = vld [vmem:[%s1 + $0x10] sm:$0xf]
  %v90 = vld [vmem:[%s1 + $0x14] sm:$0xf]
  %v91 = vld [vmem:[%s1 + $0x18] sm:$0xf]
  %v92 = vld [vmem:[%s1 + $0x1c] sm:$0xf]
  %v93 = vld [vmem:[%s1 + $0x20] sm:$0xf]
  %v94 = vld [vmem:[%s1 + $0x24] sm:$0xf]
  %v95 = vld [vmem:[%s1 + $0x28] sm:$0xf]
  %v96 = vld [vmem:[%s1 + $0x2c] sm:$0xf]
  %v97 = vld [vmem:[%s1 + $0x30] sm:$0xf]
  %v98 = vld [vmem:[%s1 + $0x34] sm:$0xf]
  %v99 = vld [vmem:[%s1 + $0x38] sm:$0xf]
  %v100 = vld [vmem:[%s1 + $0x3c] sm:$0xf]
  %v101 = vld [vmem:[%s3] sm:$0xf]
  %v102 = vld [vmem:[%s3 + $0x4] sm:$0xf]
  %v103 = vld [vmem:[%s3 + $0x8] sm:$0xf]
  %v104 = vld [vmem:[%s3 + $0xc] sm:$0xf]
  %v105 = vld [vmem:[%s3 + $0x10] sm:$0xf]
  %v106 = vld [vmem:[%s3 + $0x14] sm:$0xf]
  %v107 = vld [vmem:[%s3 + $0x18] sm:$0xf]
  %v108 = vld [vmem:[%s3 + $0x1c] sm:$0xf]
  %v109 = vld [vmem:[%s3 + $0x20] sm:$0xf]
  %v110 = vld [vmem:[%s3 + $0x24] sm:$0xf]
  %v111 = vld [vmem:[%s3 + $0x28] sm:$0xf]
  %v112 = vld [vmem:[%s3 + $0x2c] sm:$0xf]
  %v113 = vld [vmem:[%s3 + $0x30] sm:$0xf]
  %v114 = vld [vmem:[%s3 + $0x34] sm:$0xf]
  %v115 = vld [vmem:[%s3 + $0x38] sm:$0xf]
  %v116 = vld [vmem:[%s3 + $0x3c] sm:$0xf]
  %v117 = vld [vmem:[%s3 + $0x40] sm:$0xf]
  %v118 = vld [vmem:[%s3 + $0x44] sm:$0xf]
  %v119 = vld [vmem:[%s3 + $0x48] sm:$0xf]
  %v120 = vld [vmem:[%s3 + $0x4c] sm:$0xf]
  %v121 = vld [vmem:[%s3 + $0x50] sm:$0xf]
  %v122 = vld [vmem:[%s3 + $0x54] sm:$0xf]
  %v123 = vld [vmem:[%s3 + $0x58] sm:$0xf]
  %v124 = vld [vmem:[%s3 + $0x5c] sm:$0xf]
  %v125 = vld [vmem:[%s3 + $0x60] sm:$0xf]
  %v126 = vld [vmem:[%s3 + $0x64] sm:$0xf]
  %v127 = vld [vmem:[%s3 + $0x68] sm:$0xf]
  %v128 = vld [vmem:[%s3 + $0x6c] sm:$0xf]
  %v129 = vld [vmem:[%s3 + $0x70] sm:$0xf]
  %v130 = vld [vmem:[%s3 + $0x74] sm:$0xf]
  %v131 = vld [vmem:[%s3 + $0x78] sm:$0xf]
  %v132 = vld [vmem:[%s3 + $0x7c] sm:$0xf]
  %v133 = vld [vmem:[%s3 + $0x80] sm:$0xf]
  %v134 = vld [vmem:[%s3 + $0x84] sm:$0xf]
  %v135 = vld [vmem:[%s3 + $0x88] sm:$0xf]
  %v136 = vld [vmem:[%s3 + $0x8c] sm:$0xf]
  %v137 = vld [vmem:[%s3 + $0x90] sm:$0xf]
  %v138 = vld [vmem:[%s3 + $0x94] sm:$0xf]
  %v139 = vld [vmem:[%s3 + $0x98] sm:$0xf]
  %v140 = vld [vmem:[%s3 + $0x9c] sm:$0xf]
  %v141 = vld [vmem:[%s3 + $0xa0] sm:$0xf]
  %v142 = vld [vmem:[%s3 + $0xa4] sm:$0xf]
  %v143 = vld [vmem:[%s3 + $0xa8] sm:$0xf]
  %v144 = vld [vmem:[%s3 + $0xac] sm:$0xf]
  %v145 = vld [vmem:[%s3 + $0xb0] sm:$0xf]
  %v146 = vld [vmem:[%s3 + $0xb4] sm:$0xf]
  %v147 = vld [vmem:[%s3 + $0xb8] sm:$0xf]
  %v148 = vld [vmem:[%s3 + $0xbc] sm:$0xf]
  %v149 = vld [vmem:[%s3 + $0xc0] sm:$0xf]
  %v150 = vld [vmem:[%s3 + $0xc4] sm:$0xf]
  %v151 = vld [vmem:[%s3 + $0xc8] sm:$0xf]
  %v152 = vld [vmem:[%s3 + $0xcc] sm:$0xf]
  %v153 = vld [vmem:[%s3 + $0xd0] sm:$0xf]
  %v154 = vld [vmem:[%s3 + $0xd4] sm:$0xf]
  %v155 = vld [vmem:[%s3 + $0xd8] sm:$0xf]
  %v156 = vld [vmem:[%s3 + $0xdc] sm:$0xf]
  %v157 = vld [vmem:[%s3 + $0xe0] sm:$0xf]
  %v158 = vld [vmem:[%s3 + $0xe4] sm:$0xf]
  %v159 = vld [vmem:[%s3 + $0xe8] sm:$0xf]
  %v160 = vld [vmem:[%s3 + $0xec] sm:$0xf]
  %v161 = vld [vmem:[%s3 + $0xf0] sm:$0xf]
  %v162 = vld [vmem:[%s3 + $0xf4] sm:$0xf]
  %v163 = vld [vmem:[%s3 + $0xf8] sm:$0xf]
  %v164 = vld [vmem:[%s3 + $0xfc] sm:$0xf]
  %v165 = vld [vmem:[%s4] sm:$0xf]
  %v166 = vld [vmem:[%s4 + $0x4] sm:$0xf]
  %v167 = vld [vmem:[%s4 + $0x8] sm:$0xf]
  %v168 = vld [vmem:[%s4 + $0xc] sm:$0xf]
  %v169 = vld [vmem:[%s4 + $0x10] sm:$0xf]
  %v170 = vld [vmem:[%s4 + $0x14] sm:$0xf]
  %v171 = vld [vmem:[%s4 + $0x18] sm:$0xf]
  %v172 = vld [vmem:[%s4 + $0x1c] sm:$0xf]
  %v173 = vld [vmem:[%s4 + $0x20] sm:$0xf]
  %v174 = vld [vmem:[%s4 + $0x24] sm:$0xf]
  %v175 = vld [vmem:[%s4 + $0x28] sm:$0xf]
  %v176 = vld [vmem:[%s4 + $0x2c] sm:$0xf]
  %v177 = vld [vmem:[%s4 + $0x30] sm:$0xf]
  %v178 = vld [vmem:[%s4 + $0x34] sm:$0xf]
  %v179 = vld [vmem:[%s4 + $0x38] sm:$0xf]
  %v180 = vld [vmem:[%s4 + $0x3c] sm:$0xf]
  %v245 = vunpack.c.l.b16 %v101
  %v246 = vunpack.c.l.b16 %v102
  %v247 = vunpack.c.l.b16 %v103
  %v248 = vunpack.c.l.b16 %v104
  %v249 = vunpack.c.l.b16 %v105
  %v250 = vunpack.c.l.b16 %v106
  %v251 = vunpack.c.l.b16 %v107
  %v252 = vunpack.c.l.b16 %v108
  %v253 = vunpack.c.l.b16 %v109
  %v254 = vunpack.c.l.b16 %v110
  %v255 = vunpack.c.l.b16 %v111
  %v256 = vunpack.c.l.b16 %v112
  %v257 = vunpack.c.l.b16 %v113
  %v258 = vunpack.c.l.b16 %v114
  %v259 = vunpack.c.l.b16 %v115
  %v260 = vunpack.c.l.b16 %v116
  %v261 = vunpack.c.l.b16 %v117
  %v262 = vunpack.c.l.b16 %v118
  %v263 = vunpack.c.l.b16 %v119
  %v264 = vunpack.c.l.b16 %v120
  %v265 = vunpack.c.l.b16 %v121
  %v266 = vunpack.c.l.b16 %v122
  %v267 = vunpack.c.l.b16 %v123
  %v268 = vunpack.c.l.b16 %v124
  %v269 = vunpack.c.l.b16 %v125
  %v270 = vunpack.c.l.b16 %v126
  %v271 = vunpack.c.l.b16 %v127
  %v272 = vunpack.c.l.b16 %v128
  %v273 = vunpack.c.l.b16 %v129
  %v274 = vunpack.c.l.b16 %v130
  %v275 = vunpack.c.l.b16 %v131
  %v276 = vunpack.c.l.b16 %v132
  %v277 = vunpack.c.l.b16 %v133
  %v278 = vunpack.c.l.b16 %v134
  %v279 = vunpack.c.l.b16 %v135
  %v280 = vunpack.c.l.b16 %v136
  %v281 = vunpack.c.l.b16 %v137
  %v282 = vunpack.c.l.b16 %v138
  %v283 = vunpack.c.l.b16 %v139
  %v284 = vunpack.c.l.b16 %v140
  %v285 = vunpack.c.l.b16 %v141
  %v286 = vunpack.c.l.b16 %v142
  %v287 = vunpack.c.l.b16 %v143
  %v288 = vunpack.c.l.b16 %v144
  %v289 = vunpack.c.l.b16 %v145
  %v290 = vunpack.c.l.b16 %v146
  %v291 = vunpack.c.l.b16 %v147
  %v292 = vunpack.c.l.b16 %v148
  %v293 = vunpack.c.l.b16 %v149
  %v294 = vunpack.c.l.b16 %v150
  %v295 = vunpack.c.l.b16 %v151
  %v296 = vunpack.c.l.b16 %v152
  %v297 = vunpack.c.l.b16 %v153
  %v298 = vunpack.c.l.b16 %v154
  %v299 = vunpack.c.l.b16 %v155
  %v300 = vunpack.c.l.b16 %v156
  %v301 = vunpack.c.l.b16 %v157
  %v302 = vunpack.c.l.b16 %v158
  %v303 = vunpack.c.l.b16 %v159
  %v304 = vunpack.c.l.b16 %v160
  %v305 = vunpack.c.l.b16 %v161
  %v306 = vunpack.c.l.b16 %v162
  %v307 = vunpack.c.l.b16 %v163
  %v308 = vunpack.c.l.b16 %v164
  %v309 = vpack.c.b16 %v246, %v245
  %v310 = vpack.c.b16 %v248, %v247
  %v311 = vpack.c.b16 %v250, %v249
  %v312 = vpack.c.b16 %v252, %v251
  %v313 = vpack.c.b16 %v254, %v253
  %v314 = vpack.c.b16 %v256, %v255
  %v315 = vpack.c.b16 %v258, %v257
  %v316 = vpack.c.b16 %v260, %v259
  %v317 = vpack.c.b16 %v262, %v261
  %v318 = vpack.c.b16 %v264, %v263
  %v319 = vpack.c.b16 %v266, %v265
  %v320 = vpack.c.b16 %v268, %v267
  %v321 = vpack.c.b16 %v270, %v269
  %v322 = vpack.c.b16 %v272, %v271
  %v323 = vpack.c.b16 %v274, %v273
  %v324 = vpack.c.b16 %v276, %v275
  %v325 = vpack.c.b16 %v278, %v277
  %v326 = vpack.c.b16 %v280, %v279
  %v327 = vpack.c.b16 %v282, %v281
  %v328 = vpack.c.b16 %v284, %v283
  %v329 = vpack.c.b16 %v286, %v285
  %v330 = vpack.c.b16 %v288, %v287
  %v331 = vpack.c.b16 %v290, %v289
  %v332 = vpack.c.b16 %v292, %v291
  %v333 = vpack.c.b16 %v294, %v293
  %v334 = vpack.c.b16 %v296, %v295
  %v335 = vpack.c.b16 %v298, %v297
  %v336 = vpack.c.b16 %v300, %v299
  %v337 = vpack.c.b16 %v302, %v301
  %v338 = vpack.c.b16 %v304, %v303
  %v339 = vpack.c.b16 %v306, %v305
  %v340 = vpack.c.b16 %v308, %v307
  %v389 = vunpack.c.l.b16 %v165
  %v390 = vunpack.c.l.b16 %v166
  %v391 = vunpack.c.l.b16 %v167
  %v392 = vunpack.c.l.b16 %v168
  %v393 = vunpack.c.l.b16 %v169
  %v394 = vunpack.c.l.b16 %v170
  %v395 = vunpack.c.l.b16 %v171
  %v396 = vunpack.c.l.b16 %v172
  %v397 = vunpack.c.l.b16 %v173
  %v398 = vunpack.c.l.b16 %v174
  %v399 = vunpack.c.l.b16 %v175
  %v400 = vunpack.c.l.b16 %v176
  %v401 = vunpack.c.l.b16 %v177
  %v402 = vunpack.c.l.b16 %v178
  %v403 = vunpack.c.l.b16 %v179
  %v404 = vunpack.c.l.b16 %v180
  %v405 = vpack.c.b16 %v390, %v389
  %v406 = vpack.c.b16 %v392, %v391
  %v407 = vpack.c.b16 %v394, %v393
  %v408 = vpack.c.b16 %v396, %v395
  %v409 = vpack.c.b16 %v398, %v397
  %v410 = vpack.c.b16 %v400, %v399
  %v411 = vpack.c.b16 %v402, %v401
  %v412 = vpack.c.b16 %v404, %v403
  %421 = vmatprep.subr.bf16.mxu0 0
  %422 = vmatpush1.bf16.msra.mxu0 %v405
  %423 = vmatprep.subr.bf16.mxu0 0
  %424 = vmatpush1.bf16.msra.mxu0 %v406
  %425 = vmatprep.subr.bf16.mxu0 0
  %426 = vmatpush1.bf16.msra.mxu0 %v407
  %427 = vmatprep.subr.bf16.mxu0 0
  %428 = vmatpush1.bf16.msra.mxu0 %v408
  %429 = vmatprep.subr.bf16.mxu0 0
  %430 = vmatpush1.bf16.msra.mxu0 %v409
  %431 = vmatprep.subr.bf16.mxu0 0
  %432 = vmatpush1.bf16.msra.mxu0 %v410
  %433 = vmatprep.subr.bf16.mxu0 0
  %434 = vmatpush1.bf16.msra.mxu0 %v411
  %435 = vmatprep.subr.bf16.mxu0 0
  %436 = vmatpush1.bf16.msra.mxu0 %v412
  %437 = vmatprep.subr.bf16.mxu0 0
  %438 = vmatpush1.bf16.msra.mxu0 0
  %439 = vmatprep.subr.bf16.mxu0 0
  %440 = vmatpush1.bf16.msra.mxu0 0
  %441 = vmatprep.subr.bf16.mxu0 0
  %442 = vmatpush1.bf16.msra.mxu0 0
  %443 = vmatprep.subr.bf16.mxu0 0
  %444 = vmatpush1.bf16.msra.mxu0 0
  %445 = vmatprep.subr.bf16.mxu0 0
  %446 = vmatpush1.bf16.msra.mxu0 0
  %447 = vmatprep.subr.bf16.mxu0 0
  %448 = vmatpush1.bf16.msra.mxu0 0
  %449 = vmatprep.subr.bf16.mxu0 0
  %450 = vmatpush1.bf16.msra.mxu0 0
  %451 = vmatprep.subr.bf16.mxu0 0
  %452 = vmatpush1.bf16.msra.mxu0 0
  %453 = vmatprep.mubr.bf16.mxu0 0
  %454 = vmatmul.mubr.bf16.gmra.mrb[0].mxu0 %v309
  %v455 = vpop.f32.mrb[0].mxu0
  %v456 = vadd.f32 0.0, %v455
  %v457 = vpop.f32.mrb[0].mxu0
  %v458 = vpop.f32.mrb[0].mxu0
  %v459 = vadd.f32 0.0, %v458
  %v460 = vpop.f32.mrb[0].mxu0
  %461 = vmatprep.mubr.bf16.mxu0 0
  %462 = vmatmul.mubr.bf16.gmra.mrb[0].mxu0 %v310
  %v463 = vpop.f32.mrb[0].mxu0
  %v464 = vadd.f32 0.0, %v463
  %v465 = vpop.f32.mrb[0].mxu0
  %v466 = vpop.f32.mrb[0].mxu0
  %v467 = vadd.f32 0.0, %v466
  %v468 = vpop.f32.mrb[0].mxu0
  %469 = vmatprep.mubr.bf16.mxu0 0
  %470 = vmatmul.mubr.bf16.gmra.mrb[0].mxu0 %v311
  %v471 = vpop.f32.mrb[0].mxu0
  %v472 = vadd.f32 0.0, %v471
  %v473 = vpop.f32.mrb[0].mxu0
  %v474 = vpop.f32.mrb[0].mxu0
  %v475 = vadd.f32 0.0, %v474
  %v476 = vpop.f32.mrb[0].mxu0
  %477 = vmatprep.mubr.bf16.mxu0 0
  %478 = vmatmul.mubr.bf16.gmra.mrb[0].mxu0 %v312
  %v479 = vpop.f32.mrb[0].mxu0
  %v480 = vadd.f32 0.0, %v479
  %v481 = vpop.f32.mrb[0].mxu0
  %v482 = vpop.f32.mrb[0].mxu0
  %v483 = vadd.f32 0.0, %v482
  %v484 = vpop.f32.mrb[0].mxu0
  %485 = vmatprep.mubr.bf16.mxu0 0
  %486 = vmatmul.mubr.bf16.gmra.mrb[0].mxu0 %v313
  %v487 = vpop.f32.mrb[0].mxu0
  %v488 = vadd.f32 0.0, %v487
  %v489 = vpop.f32.mrb[0].mxu0
  %v490 = vpop.f32.mrb[0].mxu0
  %v491 = vadd.f32 0.0, %v490
  %v492 = vpop.f32.mrb[0].mxu0
  %493 = vmatprep.mubr.bf16.mxu0 0
  %494 = vmatmul.mubr.bf16.gmra.mrb[0].mxu0 %v314
  %v495 = vpop.f32.mrb[0].mxu0
  %v496 = vadd.f32 0.0, %v495
  %v497 = vpop.f32.mrb[0].mxu0
  %v498 = vpop.f32.mrb[0].mxu0
  %v499 = vadd.f32 0.0, %v498
  %v500 = vpop.f32.mrb[0].mxu0
  %501 = vmatprep.mubr.bf16.mxu0 0
  %502 = vmatmul.mubr.bf16.gmra.mrb[0].mxu0 %v315
  %v503 = vpop.f32.mrb[0].mxu0
  %v504 = vadd.f32 0.0, %v503
  %v505 = vpop.f32.mrb[0].mxu0
  %v506 = vpop.f32.mrb[0].mxu0
  %v507 = vadd.f32 0.0, %v506
  %v508 = vpop.f32.mrb[0].mxu0
  %509 = vmatprep.mubr.bf16.mxu0 0
  %510 = vmatmul.mubr.bf16.gmra.mrb[0].mxu0 %v316
  %v511 = vpop.f32.mrb[0].mxu0
  %v512 = vadd.f32 0.0, %v511
  %v513 = vpop.f32.mrb[0].mxu0
  %v514 = vpop.f32.mrb[0].mxu0
  %v515 = vadd.f32 0.0, %v514
  %v516 = vpop.f32.mrb[0].mxu0
  %517 = vmatprep.mubr.bf16.mxu0 0
  %518 = vmatmul.mubr.bf16.gmra.mrb[0].mxu0 %v317
  %v519 = vpop.f32.mrb[0].mxu0
  %v520 = vadd.f32 0.0, %v519
  %v521 = vpop.f32.mrb[0].mxu0
  %v522 = vpop.f32.mrb[0].mxu0
  %v523 = vadd.f32 0.0, %v522
  %v524 = vpop.f32.mrb[0].mxu0
  %525 = vmatprep.mubr.bf16.mxu0 0
  %526 = vmatmul.mubr.bf16.gmra.mrb[0].mxu0 %v318
  %v527 = vpop.f32.mrb[0].mxu0
  %v528 = vadd.f32 0.0, %v527
  %v529 = vpop.f32.mrb[0].mxu0
  %v530 = vpop.f32.mrb[0].mxu0
  %v531 = vadd.f32 0.0, %v530
  %v532 = vpop.f32.mrb[0].mxu0
  %533 = vmatprep.mubr.bf16.mxu0 0
  %534 = vmatmul.mubr.bf16.gmra.mrb[0].mxu0 %v319
  %v535 = vpop.f32.mrb[0].mxu0
  %v536 = vadd.f32 0.0, %v535
  %v537 = vpop.f32.mrb[0].mxu0
  %v538 = vpop.f32.mrb[0].mxu0
  %v539 = vadd.f32 0.0, %v538
  %v540 = vpop.f32.mrb[0].mxu0
  %541 = vmatprep.mubr.bf16.mxu0 0
  %542 = vmatmul.mubr.bf16.gmra.mrb[0].mxu0 %v320
  %v543 = vpop.f32.mrb[0].mxu0
  %v544 = vadd.f32 0.0, %v543
  %v545 = vpop.f32.mrb[0].mxu0
  %v546 = vpop.f32.mrb[0].mxu0
  %v547 = vadd.f32 0.0, %v546
  %v548 = vpop.f32.mrb[0].mxu0
  %549 = vmatprep.mubr.bf16.mxu0 0
  %550 = vmatmul.mubr.bf16.gmra.mrb[0].mxu0 %v321
  %v551 = vpop.f32.mrb[0].mxu0
  %v552 = vadd.f32 0.0, %v551
  %v553 = vpop.f32.mrb[0].mxu0
  %v554 = vpop.f32.mrb[0].mxu0
  %v555 = vadd.f32 0.0, %v554
  %v556 = vpop.f32.mrb[0].mxu0
  %557 = vmatprep.mubr.bf16.mxu0 0
  %558 = vmatmul.mubr.bf16.gmra.mrb[0].mxu0 %v322
  %v559 = vpop.f32.mrb[0].mxu0
  %v560 = vadd.f32 0.0, %v559
  %v561 = vpop.f32.mrb[0].mxu0
  %v562 = vpop.f32.mrb[0].mxu0
  %v563 = vadd.f32 0.0, %v562
  %v564 = vpop.f32.mrb[0].mxu0
  %565 = vmatprep.mubr.bf16.mxu0 0
  %566 = vmatmul.mubr.bf16.gmra.mrb[0].mxu0 %v323
  %v567 = vpop.f32.mrb[0].mxu0
  %v568 = vadd.f32 0.0, %v567
  %v569 = vpop.f32.mrb[0].mxu0
  %v570 = vpop.f32.mrb[0].mxu0
  %v571 = vadd.f32 0.0, %v570
  %v572 = vpop.f32.mrb[0].mxu0
  %573 = vmatprep.mubr.bf16.mxu0 0
  %574 = vmatmul.mubr.bf16.gmra.mrb[0].mxu0 %v324
  %v575 = vpop.f32.mrb[0].mxu0
  %v576 = vadd.f32 0.0, %v575
  %v577 = vpop.f32.mrb[0].mxu0
  %v578 = vpop.f32.mrb[0].mxu0
  %v579 = vadd.f32 0.0, %v578
  %v580 = vpop.f32.mrb[0].mxu0
  %581 = vmatprep.mubr.bf16.mxu0 0
  %582 = vmatmul.mubr.bf16.gmra.mrb[0].mxu0 %v325
  %v583 = vpop.f32.mrb[0].mxu0
  %v584 = vadd.f32 0.0, %v583
  %v585 = vpop.f32.mrb[0].mxu0
  %v586 = vpop.f32.mrb[0].mxu0
  %v587 = vadd.f32 0.0, %v586
  %v588 = vpop.f32.mrb[0].mxu0
  %589 = vmatprep.mubr.bf16.mxu0 0
  %590 = vmatmul.mubr.bf16.gmra.mrb[0].mxu0 %v326
  %v591 = vpop.f32.mrb[0].mxu0
  %v592 = vadd.f32 0.0, %v591
  %v593 = vpop.f32.mrb[0].mxu0
  %v594 = vpop.f32.mrb[0].mxu0
  %v595 = vadd.f32 0.0, %v594
  %v596 = vpop.f32.mrb[0].mxu0
  %597 = vmatprep.mubr.bf16.mxu0 0
  %598 = vmatmul.mubr.bf16.gmra.mrb[0].mxu0 %v327
  %v599 = vpop.f32.mrb[0].mxu0
  %v600 = vadd.f32 0.0, %v599
  %v601 = vpop.f32.mrb[0].mxu0
  %v602 = vpop.f32.mrb[0].mxu0
  %v603 = vadd.f32 0.0, %v602
  %v604 = vpop.f32.mrb[0].mxu0
  %605 = vmatprep.mubr.bf16.mxu0 0
  %606 = vmatmul.mubr.bf16.gmra.mrb[0].mxu0 %v328
  %v607 = vpop.f32.mrb[0].mxu0
  %v608 = vadd.f32 0.0, %v607
  %v609 = vpop.f32.mrb[0].mxu0
  %v610 = vpop.f32.mrb[0].mxu0
  %v611 = vadd.f32 0.0, %v610
  %v612 = vpop.f32.mrb[0].mxu0
  %613 = vmatprep.mubr.bf16.mxu0 0
  %614 = vmatmul.mubr.bf16.gmra.mrb[0].mxu0 %v329
  %v615 = vpop.f32.mrb[0].mxu0
  %v616 = vadd.f32 0.0, %v615
  %v617 = vpop.f32.mrb[0].mxu0
  %v618 = vpop.f32.mrb[0].mxu0
  %v619 = vadd.f32 0.0, %v618
  %v620 = vpop.f32.mrb[0].mxu0
  %621 = vmatprep.mubr.bf16.mxu0 0
  %622 = vmatmul.mubr.bf16.gmra.mrb[0].mxu0 %v330
  %v623 = vpop.f32.mrb[0].mxu0
  %v624 = vadd.f32 0.0, %v623
  %v625 = vpop.f32.mrb[0].mxu0
  %v626 = vpop.f32.mrb[0].mxu0
  %v627 = vadd.f32 0.0, %v626
  %v628 = vpop.f32.mrb[0].mxu0
  %629 = vmatprep.mubr.bf16.mxu0 0
  %630 = vmatmul.mubr.bf16.gmra.mrb[0].mxu0 %v331
  %v631 = vpop.f32.mrb[0].mxu0
  %v632 = vadd.f32 0.0, %v631
  %v633 = vpop.f32.mrb[0].mxu0
  %v634 = vpop.f32.mrb[0].mxu0
  %v635 = vadd.f32 0.0, %v634
  %v636 = vpop.f32.mrb[0].mxu0
  %637 = vmatprep.mubr.bf16.mxu0 0
  %638 = vmatmul.mubr.bf16.gmra.mrb[0].mxu0 %v332
  %v639 = vpop.f32.mrb[0].mxu0
  %v640 = vadd.f32 0.0, %v639
  %v641 = vpop.f32.mrb[0].mxu0
  %v642 = vpop.f32.mrb[0].mxu0
  %v643 = vadd.f32 0.0, %v642
  %v644 = vpop.f32.mrb[0].mxu0
  %645 = vmatprep.mubr.bf16.mxu0 0
  %646 = vmatmul.mubr.bf16.gmra.mrb[0].mxu0 %v333
  %v647 = vpop.f32.mrb[0].mxu0
  %v648 = vadd.f32 0.0, %v647
  %v649 = vpop.f32.mrb[0].mxu0
  %v650 = vpop.f32.mrb[0].mxu0
  %v651 = vadd.f32 0.0, %v650
  %v652 = vpop.f32.mrb[0].mxu0
  %653 = vmatprep.mubr.bf16.mxu0 0
  %654 = vmatmul.mubr.bf16.gmra.mrb[0].mxu0 %v334
  %v655 = vpop.f32.mrb[0].mxu0
  %v656 = vadd.f32 0.0, %v655
  %v657 = vpop.f32.mrb[0].mxu0
  %v658 = vpop.f32.mrb[0].mxu0
  %v659 = vadd.f32 0.0, %v658
  %v660 = vpop.f32.mrb[0].mxu0
  %661 = vmatprep.mubr.bf16.mxu0 0
  %662 = vmatmul.mubr.bf16.gmra.mrb[0].mxu0 %v335
  %v663 = vpop.f32.mrb[0].mxu0
  %v664 = vadd.f32 0.0, %v663
  %v665 = vpop.f32.mrb[0].mxu0
  %v666 = vpop.f32.mrb[0].mxu0
  %v667 = vadd.f32 0.0, %v666
  %v668 = vpop.f32.mrb[0].mxu0
  %669 = vmatprep.mubr.bf16.mxu0 0
  %670 = vmatmul.mubr.bf16.gmra.mrb[0].mxu0 %v336
  %v671 = vpop.f32.mrb[0].mxu0
  %v672 = vadd.f32 0.0, %v671
  %v673 = vpop.f32.mrb[0].mxu0
  %v674 = vpop.f32.mrb[0].mxu0
  %v675 = vadd.f32 0.0, %v674
  %v676 = vpop.f32.mrb[0].mxu0
  %677 = vmatprep.mubr.bf16.mxu0 0
  %678 = vmatmul.mubr.bf16.gmra.mrb[0].mxu0 %v337
  %v679 = vpop.f32.mrb[0].mxu0
  %v680 = vadd.f32 0.0, %v679
  %v681 = vpop.f32.mrb[0].mxu0
  %v682 = vpop.f32.mrb[0].mxu0
  %v683 = vadd.f32 0.0, %v682
  %v684 = vpop.f32.mrb[0].mxu0
  %685 = vmatprep.mubr.bf16.mxu0 0
  %686 = vmatmul.mubr.bf16.gmra.mrb[0].mxu0 %v338
  %v687 = vpop.f32.mrb[0].mxu0
  %v688 = vadd.f32 0.0, %v687
  %v689 = vpop.f32.mrb[0].mxu0
  %v690 = vpop.f32.mrb[0].mxu0
  %v691 = vadd.f32 0.0, %v690
  %v692 = vpop.f32.mrb[0].mxu0
  %693 = vmatprep.mubr.bf16.mxu0 0
  %694 = vmatmul.mubr.bf16.gmra.mrb[0].mxu0 %v339
  %v695 = vpop.f32.mrb[0].mxu0
  %v696 = vadd.f32 0.0, %v695
  %v697 = vpop.f32.mrb[0].mxu0
  %v698 = vpop.f32.mrb[0].mxu0
  %v699 = vadd.f32 0.0, %v698
  %v700 = vpop.f32.mrb[0].mxu0
  %701 = vmatprep.mubr.bf16.mxu0 0
  %702 = vmatmul.mubr.bf16.gmra.mrb[0].mxu0 %v340
  %v703 = vpop.f32.mrb[0].mxu0
  %v704 = vadd.f32 0.0, %v703
  %v705 = vpop.f32.mrb[0].mxu0
  %v706 = vpop.f32.mrb[0].mxu0
  %v707 = vadd.f32 0.0, %v706
  %v708 = vpop.f32.mrb[0].mxu0
  %709 = vdwg.mxu0
  %v774 = vunpack.c.l.b16 %v21
  %v775 = vunpack.c.l.b16 %v22
  %v776 = vunpack.c.l.b16 %v23
  %v777 = vunpack.c.l.b16 %v24
  %v778 = vunpack.c.l.b16 %v25
  %v779 = vunpack.c.l.b16 %v26
  %v780 = vunpack.c.l.b16 %v27
  %v781 = vunpack.c.l.b16 %v28
  %v782 = vunpack.c.l.b16 %v29
  %v783 = vunpack.c.l.b16 %v30
  %v784 = vunpack.c.l.b16 %v31
  %v785 = vunpack.c.l.b16 %v32
  %v786 = vunpack.c.l.b16 %v33
  %v787 = vunpack.c.l.b16 %v34
  %v788 = vunpack.c.l.b16 %v35
  %v789 = vunpack.c.l.b16 %v36
  %v790 = vunpack.c.l.b16 %v37
  %v791 = vunpack.c.l.b16 %v38
  %v792 = vunpack.c.l.b16 %v39
  %v793 = vunpack.c.l.b16 %v40
  %v794 = vunpack.c.l.b16 %v41
  %v795 = vunpack.c.l.b16 %v42
  %v796 = vunpack.c.l.b16 %v43
  %v797 = vunpack.c.l.b16 %v44
  %v798 = vunpack.c.l.b16 %v45
  %v799 = vunpack.c.l.b16 %v46
  %v800 = vunpack.c.l.b16 %v47
  %v801 = vunpack.c.l.b16 %v48
  %v802 = vunpack.c.l.b16 %v49
  %v803 = vunpack.c.l.b16 %v50
  %v804 = vunpack.c.l.b16 %v51
  %v805 = vunpack.c.l.b16 %v52
  %v806 = vunpack.c.l.b16 %v53
  %v807 = vunpack.c.l.b16 %v54
  %v808 = vunpack.c.l.b16 %v55
  %v809 = vunpack.c.l.b16 %v56
  %v810 = vunpack.c.l.b16 %v57
  %v811 = vunpack.c.l.b16 %v58
  %v812 = vunpack.c.l.b16 %v59
  %v813 = vunpack.c.l.b16 %v60
  %v814 = vunpack.c.l.b16 %v61
  %v815 = vunpack.c.l.b16 %v62
  %v816 = vunpack.c.l.b16 %v63
  %v817 = vunpack.c.l.b16 %v64
  %v818 = vunpack.c.l.b16 %v65
  %v819 = vunpack.c.l.b16 %v66
  %v820 = vunpack.c.l.b16 %v67
  %v821 = vunpack.c.l.b16 %v68
  %v822 = vunpack.c.l.b16 %v69
  %v823 = vunpack.c.l.b16 %v70
  %v824 = vunpack.c.l.b16 %v71
  %v825 = vunpack.c.l.b16 %v72
  %v826 = vunpack.c.l.b16 %v73
  %v827 = vunpack.c.l.b16 %v74
  %v828 = vunpack.c.l.b16 %v75
  %v829 = vunpack.c.l.b16 %v76
  %v830 = vunpack.c.l.b16 %v77
  %v831 = vunpack.c.l.b16 %v78
  %v832 = vunpack.c.l.b16 %v79
  %v833 = vunpack.c.l.b16 %v80
  %v834 = vunpack.c.l.b16 %v81
  %v835 = vunpack.c.l.b16 %v82
  %v836 = vunpack.c.l.b16 %v83
  %v837 = vunpack.c.l.b16 %v84
  %v838 = vpack.c.b16 %v775, %v774
  %v839 = vpack.c.b16 %v777, %v776
  %v840 = vpack.c.b16 %v779, %v778
  %v841 = vpack.c.b16 %v781, %v780
  %v842 = vpack.c.b16 %v783, %v782
  %v843 = vpack.c.b16 %v785, %v784
  %v844 = vpack.c.b16 %v787, %v786
  %v845 = vpack.c.b16 %v789, %v788
  %v846 = vpack.c.b16 %v791, %v790
  %v847 = vpack.c.b16 %v793, %v792
  %v848 = vpack.c.b16 %v795, %v794
  %v849 = vpack.c.b16 %v797, %v796
  %v850 = vpack.c.b16 %v799, %v798
  %v851 = vpack.c.b16 %v801, %v800
  %v852 = vpack.c.b16 %v803, %v802
  %v853 = vpack.c.b16 %v805, %v804
  %v854 = vpack.c.b16 %v807, %v806
  %v855 = vpack.c.b16 %v809, %v808
  %v856 = vpack.c.b16 %v811, %v810
  %v857 = vpack.c.b16 %v813, %v812
  %v858 = vpack.c.b16 %v815, %v814
  %v859 = vpack.c.b16 %v817, %v816
  %v860 = vpack.c.b16 %v819, %v818
  %v861 = vpack.c.b16 %v821, %v820
  %v862 = vpack.c.b16 %v823, %v822
  %v863 = vpack.c.b16 %v825, %v824
  %v864 = vpack.c.b16 %v827, %v826
  %v865 = vpack.c.b16 %v829, %v828
  %v866 = vpack.c.b16 %v831, %v830
  %v867 = vpack.c.b16 %v833, %v832
  %v868 = vpack.c.b16 %v835, %v834
  %v869 = vpack.c.b16 %v837, %v836
  %v918 = vunpack.c.l.b16 %v85
  %v919 = vunpack.c.l.b16 %v86
  %v920 = vunpack.c.l.b16 %v87
  %v921 = vunpack.c.l.b16 %v88
  %v922 = vunpack.c.l.b16 %v89
  %v923 = vunpack.c.l.b16 %v90
  %v924 = vunpack.c.l.b16 %v91
  %v925 = vunpack.c.l.b16 %v92
  %v926 = vunpack.c.l.b16 %v93
  %v927 = vunpack.c.l.b16 %v94
  %v928 = vunpack.c.l.b16 %v95
  %v929 = vunpack.c.l.b16 %v96
  %v930 = vunpack.c.l.b16 %v97
  %v931 = vunpack.c.l.b16 %v98
  %v932 = vunpack.c.l.b16 %v99
  %v933 = vunpack.c.l.b16 %v100
  %v934 = vpack.c.b16 %v919, %v918
  %v935 = vpack.c.b16 %v921, %v920
  %v936 = vpack.c.b16 %v923, %v922
  %v937 = vpack.c.b16 %v925, %v924
  %v938 = vpack.c.b16 %v927, %v926
  %v939 = vpack.c.b16 %v929, %v928
  %v940 = vpack.c.b16 %v931, %v930
  %v941 = vpack.c.b16 %v933, %v932
  %950 = vmatprep.subr.bf16.mxu0 0
  %951 = vmatpush1.bf16.msra.mxu0 %v934
  %952 = vmatprep.subr.bf16.mxu0 0
  %953 = vmatpush1.bf16.msra.mxu0 %v935
  %954 = vmatprep.subr.bf16.mxu0 0
  %955 = vmatpush1.bf16.msra.mxu0 %v936
  %956 = vmatprep.subr.bf16.mxu0 0
  %957 = vmatpush1.bf16.msra.mxu0 %v937
  %958 = vmatprep.subr.bf16.mxu0 0
  %959 = vmatpush1.bf16.msra.mxu0 %v938
  %960 = vmatprep.subr.bf16.mxu0 0
  %961 = vmatpush1.bf16.msra.mxu0 %v939
  %962 = vmatprep.subr.bf16.mxu0 0
  %963 = vmatpush1.bf16.msra.mxu0 %v940
  %964 = vmatprep.subr.bf16.mxu0 0
  %965 = vmatpush1.bf16.msra.mxu0 %v941
  %966 = vmatprep.subr.bf16.mxu0 0
  %967 = vmatpush1.bf16.msra.mxu0 0
  %968 = vmatprep.subr.bf16.mxu0 0
  %969 = vmatpush1.bf16.msra.mxu0 0
  %970 = vmatprep.subr.bf16.mxu0 0
  %971 = vmatpush1.bf16.msra.mxu0 0
  %972 = vmatprep.subr.bf16.mxu0 0
  %973 = vmatpush1.bf16.msra.mxu0 0
  %974 = vmatprep.subr.bf16.mxu0 0
  %975 = vmatpush1.bf16.msra.mxu0 0
  %976 = vmatprep.subr.bf16.mxu0 0
  %977 = vmatpush1.bf16.msra.mxu0 0
  %978 = vmatprep.subr.bf16.mxu0 0
  %979 = vmatpush1.bf16.msra.mxu0 0
  %980 = vmatprep.subr.bf16.mxu0 0
  %981 = vmatpush1.bf16.msra.mxu0 0
  %982 = vmatprep.mubr.bf16.mxu0 0
  %983 = vmatmul.mubr.bf16.gmra.mrb[0].mxu0 %v838
  %v984 = vpop.f32.mrb[0].mxu0
  %v985 = vadd.f32 %v456, %v984
  %v986 = vpop.f32.mrb[0].mxu0
  %v987 = vpop.f32.mrb[0].mxu0
  %v988 = vadd.f32 %v459, %v987
  %v989 = vpop.f32.mrb[0].mxu0
  %990 = vmatprep.mubr.bf16.mxu0 0
  %991 = vmatmul.mubr.bf16.gmra.mrb[0].mxu0 %v839
  %v992 = vpop.f32.mrb[0].mxu0
  %v993 = vadd.f32 %v464, %v992
  %v994 = vpop.f32.mrb[0].mxu0
  %v995 = vpop.f32.mrb[0].mxu0
  %v996 = vadd.f32 %v467, %v995
  %v997 = vpop.f32.mrb[0].mxu0
  %998 = vmatprep.mubr.bf16.mxu0 0
  %999 = vmatmul.mubr.bf16.gmra.mrb[0].mxu0 %v840
  %v1000 = vpop.f32.mrb[0].mxu0
  %v1001 = vadd.f32 %v472, %v1000
  %v1002 = vpop.f32.mrb[0].mxu0
  %v1003 = vpop.f32.mrb[0].mxu0
  %v1004 = vadd.f32 %v475, %v1003
  %v1005 = vpop.f32.mrb[0].mxu0
  %1006 = vmatprep.mubr.bf16.mxu0 0
  %1007 = vmatmul.mubr.bf16.gmra.mrb[0].mxu0 %v841
  %v1008 = vpop.f32.mrb[0].mxu0
  %v1009 = vadd.f32 %v480, %v1008
  %v1010 = vpop.f32.mrb[0].mxu0
  %v1011 = vpop.f32.mrb[0].mxu0
  %v1012 = vadd.f32 %v483, %v1011
  %v1013 = vpop.f32.mrb[0].mxu0
  %1014 = vmatprep.mubr.bf16.mxu0 0
  %1015 = vmatmul.mubr.bf16.gmra.mrb[0].mxu0 %v842
  %v1016 = vpop.f32.mrb[0].mxu0
  %v1017 = vadd.f32 %v488, %v1016
  %v1018 = vpop.f32.mrb[0].mxu0
  %v1019 = vpop.f32.mrb[0].mxu0
  %v1020 = vadd.f32 %v491, %v1019
  %v1021 = vpop.f32.mrb[0].mxu0
  %1022 = vmatprep.mubr.bf16.mxu0 0
  %1023 = vmatmul.mubr.bf16.gmra.mrb[0].mxu0 %v843
  %v1024 = vpop.f32.mrb[0].mxu0
  %v1025 = vadd.f32 %v496, %v1024
  %v1026 = vpop.f32.mrb[0].mxu0
  %v1027 = vpop.f32.mrb[0].mxu0
  %v1028 = vadd.f32 %v499, %v1027
  %v1029 = vpop.f32.mrb[0].mxu0
  %1030 = vmatprep.mubr.bf16.mxu0 0
  %1031 = vmatmul.mubr.bf16.gmra.mrb[0].mxu0 %v844
  %v1032 = vpop.f32.mrb[0].mxu0
  %v1033 = vadd.f32 %v504, %v1032
  %v1034 = vpop.f32.mrb[0].mxu0
  %v1035 = vpop.f32.mrb[0].mxu0
  %v1036 = vadd.f32 %v507, %v1035
  %v1037 = vpop.f32.mrb[0].mxu0
  %1038 = vmatprep.mubr.bf16.mxu0 0
  %1039 = vmatmul.mubr.bf16.gmra.mrb[0].mxu0 %v845
  %v1040 = vpop.f32.mrb[0].mxu0
  %v1041 = vadd.f32 %v512, %v1040
  %v1042 = vpop.f32.mrb[0].mxu0
  %v1043 = vpop.f32.mrb[0].mxu0
  %v1044 = vadd.f32 %v515, %v1043
  %v1045 = vpop.f32.mrb[0].mxu0
  %1046 = vmatprep.mubr.bf16.mxu0 0
  %1047 = vmatmul.mubr.bf16.gmra.mrb[0].mxu0 %v846
  %v1048 = vpop.f32.mrb[0].mxu0
  %v1049 = vadd.f32 %v520, %v1048
  %v1050 = vpop.f32.mrb[0].mxu0
  %v1051 = vpop.f32.mrb[0].mxu0
  %v1052 = vadd.f32 %v523, %v1051
  %v1053 = vpop.f32.mrb[0].mxu0
  %1054 = vmatprep.mubr.bf16.mxu0 0
  %1055 = vmatmul.mubr.bf16.gmra.mrb[0].mxu0 %v847
  %v1056 = vpop.f32.mrb[0].mxu0
  %v1057 = vadd.f32 %v528, %v1056
  %v1058 = vpop.f32.mrb[0].mxu0
  %v1059 = vpop.f32.mrb[0].mxu0
  %v1060 = vadd.f32 %v531, %v1059
  %v1061 = vpop.f32.mrb[0].mxu0
  %1062 = vmatprep.mubr.bf16.mxu0 0
  %1063 = vmatmul.mubr.bf16.gmra.mrb[0].mxu0 %v848
  %v1064 = vpop.f32.mrb[0].mxu0
  %v1065 = vadd.f32 %v536, %v1064
  %v1066 = vpop.f32.mrb[0].mxu0
  %v1067 = vpop.f32.mrb[0].mxu0
  %v1068 = vadd.f32 %v539, %v1067
  %v1069 = vpop.f32.mrb[0].mxu0
  %1070 = vmatprep.mubr.bf16.mxu0 0
  %1071 = vmatmul.mubr.bf16.gmra.mrb[0].mxu0 %v849
  %v1072 = vpop.f32.mrb[0].mxu0
  %v1073 = vadd.f32 %v544, %v1072
  %v1074 = vpop.f32.mrb[0].mxu0
  %v1075 = vpop.f32.mrb[0].mxu0
  %v1076 = vadd.f32 %v547, %v1075
  %v1077 = vpop.f32.mrb[0].mxu0
  %1078 = vmatprep.mubr.bf16.mxu0 0
  %1079 = vmatmul.mubr.bf16.gmra.mrb[0].mxu0 %v850
  %v1080 = vpop.f32.mrb[0].mxu0
  %v1081 = vadd.f32 %v552, %v1080
  %v1082 = vpop.f32.mrb[0].mxu0
  %v1083 = vpop.f32.mrb[0].mxu0
  %v1084 = vadd.f32 %v555, %v1083
  %v1085 = vpop.f32.mrb[0].mxu0
  %1086 = vmatprep.mubr.bf16.mxu0 0
  %1087 = vmatmul.mubr.bf16.gmra.mrb[0].mxu0 %v851
  %v1088 = vpop.f32.mrb[0].mxu0
  %v1089 = vadd.f32 %v560, %v1088
  %v1090 = vpop.f32.mrb[0].mxu0
  %v1091 = vpop.f32.mrb[0].mxu0
  %v1092 = vadd.f32 %v563, %v1091
  %v1093 = vpop.f32.mrb[0].mxu0
  %1094 = vmatprep.mubr.bf16.mxu0 0
  %1095 = vmatmul.mubr.bf16.gmra.mrb[0].mxu0 %v852
  %v1096 = vpop.f32.mrb[0].mxu0
  %v1097 = vadd.f32 %v568, %v1096
  %v1098 = vpop.f32.mrb[0].mxu0
  %v1099 = vpop.f32.mrb[0].mxu0
  %v1100 = vadd.f32 %v571, %v1099
  %v1101 = vpop.f32.mrb[0].mxu0
  %1102 = vmatprep.mubr.bf16.mxu0 0
  %1103 = vmatmul.mubr.bf16.gmra.mrb[0].mxu0 %v853
  %v1104 = vpop.f32.mrb[0].mxu0
  %v1105 = vadd.f32 %v576, %v1104
  %v1106 = vpop.f32.mrb[0].mxu0
  %v1107 = vpop.f32.mrb[0].mxu0
  %v1108 = vadd.f32 %v579, %v1107
  %v1109 = vpop.f32.mrb[0].mxu0
  %1110 = vmatprep.mubr.bf16.mxu0 0
  %1111 = vmatmul.mubr.bf16.gmra.mrb[0].mxu0 %v854
  %v1112 = vpop.f32.mrb[0].mxu0
  %v1113 = vadd.f32 %v584, %v1112
  %v1114 = vpop.f32.mrb[0].mxu0
  %v1115 = vpop.f32.mrb[0].mxu0
  %v1116 = vadd.f32 %v587, %v1115
  %v1117 = vpop.f32.mrb[0].mxu0
  %1118 = vmatprep.mubr.bf16.mxu0 0
  %1119 = vmatmul.mubr.bf16.gmra.mrb[0].mxu0 %v855
  %v1120 = vpop.f32.mrb[0].mxu0
  %v1121 = vadd.f32 %v592, %v1120
  %v1122 = vpop.f32.mrb[0].mxu0
  %v1123 = vpop.f32.mrb[0].mxu0
  %v1124 = vadd.f32 %v595, %v1123
  %v1125 = vpop.f32.mrb[0].mxu0
  %1126 = vmatprep.mubr.bf16.mxu0 0
  %1127 = vmatmul.mubr.bf16.gmra.mrb[0].mxu0 %v856
  %v1128 = vpop.f32.mrb[0].mxu0
  %v1129 = vadd.f32 %v600, %v1128
  %v1130 = vpop.f32.mrb[0].mxu0
  %v1131 = vpop.f32.mrb[0].mxu0
  %v1132 = vadd.f32 %v603, %v1131
  %v1133 = vpop.f32.mrb[0].mxu0
  %1134 = vmatprep.mubr.bf16.mxu0 0
  %1135 = vmatmul.mubr.bf16.gmra.mrb[0].mxu0 %v857
  %v1136 = vpop.f32.mrb[0].mxu0
  %v1137 = vadd.f32 %v608, %v1136
  %v1138 = vpop.f32.mrb[0].mxu0
  %v1139 = vpop.f32.mrb[0].mxu0
  %v1140 = vadd.f32 %v611, %v1139
  %v1141 = vpop.f32.mrb[0].mxu0
  %1142 = vmatprep.mubr.bf16.mxu0 0
  %1143 = vmatmul.mubr.bf16.gmra.mrb[0].mxu0 %v858
  %v1144 = vpop.f32.mrb[0].mxu0
  %v1145 = vadd.f32 %v616, %v1144
  %v1146 = vpop.f32.mrb[0].mxu0
  %v1147 = vpop.f32.mrb[0].mxu0
  %v1148 = vadd.f32 %v619, %v1147
  %v1149 = vpop.f32.mrb[0].mxu0
  %1150 = vmatprep.mubr.bf16.mxu0 0
  %1151 = vmatmul.mubr.bf16.gmra.mrb[0].mxu0 %v859
  %v1152 = vpop.f32.mrb[0].mxu0
  %v1153 = vadd.f32 %v624, %v1152
  %v1154 = vpop.f32.mrb[0].mxu0
  %v1155 = vpop.f32.mrb[0].mxu0
  %v1156 = vadd.f32 %v627, %v1155
  %v1157 = vpop.f32.mrb[0].mxu0
  %1158 = vmatprep.mubr.bf16.mxu0 0
  %1159 = vmatmul.mubr.bf16.gmra.mrb[0].mxu0 %v860
  %v1160 = vpop.f32.mrb[0].mxu0
  %v1161 = vadd.f32 %v632, %v1160
  %v1162 = vpop.f32.mrb[0].mxu0
  %v1163 = vpop.f32.mrb[0].mxu0
  %v1164 = vadd.f32 %v635, %v1163
  %v1165 = vpop.f32.mrb[0].mxu0
  %1166 = vmatprep.mubr.bf16.mxu0 0
  %1167 = vmatmul.mubr.bf16.gmra.mrb[0].mxu0 %v861
  %v1168 = vpop.f32.mrb[0].mxu0
  %v1169 = vadd.f32 %v640, %v1168
  %v1170 = vpop.f32.mrb[0].mxu0
  %v1171 = vpop.f32.mrb[0].mxu0
  %v1172 = vadd.f32 %v643, %v1171
  %v1173 = vpop.f32.mrb[0].mxu0
  %1174 = vmatprep.mubr.bf16.mxu0 0
  %1175 = vmatmul.mubr.bf16.gmra.mrb[0].mxu0 %v862
  %v1176 = vpop.f32.mrb[0].mxu0
  %v1177 = vadd.f32 %v648, %v1176
  %v1178 = vpop.f32.mrb[0].mxu0
  %v1179 = vpop.f32.mrb[0].mxu0
  %v1180 = vadd.f32 %v651, %v1179
  %v1181 = vpop.f32.mrb[0].mxu0
  %1182 = vmatprep.mubr.bf16.mxu0 0
  %1183 = vmatmul.mubr.bf16.gmra.mrb[0].mxu0 %v863
  %v1184 = vpop.f32.mrb[0].mxu0
  %v1185 = vadd.f32 %v656, %v1184
  %v1186 = vpop.f32.mrb[0].mxu0
  %v1187 = vpop.f32.mrb[0].mxu0
  %v1188 = vadd.f32 %v659, %v1187
  %v1189 = vpop.f32.mrb[0].mxu0
  %1190 = vmatprep.mubr.bf16.mxu0 0
  %1191 = vmatmul.mubr.bf16.gmra.mrb[0].mxu0 %v864
  %v1192 = vpop.f32.mrb[0].mxu0
  %v1193 = vadd.f32 %v664, %v1192
  %v1194 = vpop.f32.mrb[0].mxu0
  %v1195 = vpop.f32.mrb[0].mxu0
  %v1196 = vadd.f32 %v667, %v1195
  %v1197 = vpop.f32.mrb[0].mxu0
  %1198 = vmatprep.mubr.bf16.mxu0 0
  %1199 = vmatmul.mubr.bf16.gmra.mrb[0].mxu0 %v865
  %v1200 = vpop.f32.mrb[0].mxu0
  %v1201 = vadd.f32 %v672, %v1200
  %v1202 = vpop.f32.mrb[0].mxu0
  %v1203 = vpop.f32.mrb[0].mxu0
  %v1204 = vadd.f32 %v675, %v1203
  %v1205 = vpop.f32.mrb[0].mxu0
  %1206 = vmatprep.mubr.bf16.mxu0 0
  %1207 = vmatmul.mubr.bf16.gmra.mrb[0].mxu0 %v866
  %v1208 = vpop.f32.mrb[0].mxu0
  %v1209 = vadd.f32 %v680, %v1208
  %v1210 = vpop.f32.mrb[0].mxu0
  %v1211 = vpop.f32.mrb[0].mxu0
  %v1212 = vadd.f32 %v683, %v1211
  %v1213 = vpop.f32.mrb[0].mxu0
  %1214 = vmatprep.mubr.bf16.mxu0 0
  %1215 = vmatmul.mubr.bf16.gmra.mrb[0].mxu0 %v867
  %v1216 = vpop.f32.mrb[0].mxu0
  %v1217 = vadd.f32 %v688, %v1216
  %v1218 = vpop.f32.mrb[0].mxu0
  %v1219 = vpop.f32.mrb[0].mxu0
  %v1220 = vadd.f32 %v691, %v1219
  %v1221 = vpop.f32.mrb[0].mxu0
  %1222 = vmatprep.mubr.bf16.mxu0 0
  %1223 = vmatmul.mubr.bf16.gmra.mrb[0].mxu0 %v868
  %v1224 = vpop.f32.mrb[0].mxu0
  %v1225 = vadd.f32 %v696, %v1224
  %v1226 = vpop.f32.mrb[0].mxu0
  %v1227 = vpop.f32.mrb[0].mxu0
  %v1228 = vadd.f32 %v699, %v1227
  %v1229 = vpop.f32.mrb[0].mxu0
  %1230 = vmatprep.mubr.bf16.mxu0 0
  %1231 = vmatmul.mubr.bf16.gmra.mrb[0].mxu0 %v869
  %v1232 = vpop.f32.mrb[0].mxu0
  %v1233 = vadd.f32 %v704, %v1232
  %v1234 = vpop.f32.mrb[0].mxu0
  %v1235 = vpop.f32.mrb[0].mxu0
  %v1236 = vadd.f32 %v707, %v1235
  %v1237 = vpop.f32.mrb[0].mxu0
  %1238 = vdwg.mxu0
  %v1239 = vld [vmem:[%s2] sm:$0x1]
  %v1241 = vlaneseq
  %v1242 = vshrl.u32 %v1241, 7
  %v1243 = vsub.s32 0, %v1242
  %v1244 = vrot.slane %v1239, %v1243
  %v1246 = vadd.f32 %v985, %v1244
  %v1247 = vadd.f32 %v988, %v1244
  %v1248 = vadd.f32 %v993, %v1244
  %v1249 = vadd.f32 %v996, %v1244
  %v1250 = vadd.f32 %v1001, %v1244
  %v1251 = vadd.f32 %v1004, %v1244
  %v1252 = vadd.f32 %v1009, %v1244
  %v1253 = vadd.f32 %v1012, %v1244
  %v1254 = vadd.f32 %v1017, %v1244
  %v1255 = vadd.f32 %v1020, %v1244
  %v1256 = vadd.f32 %v1025, %v1244
  %v1257 = vadd.f32 %v1028, %v1244
  %v1258 = vadd.f32 %v1033, %v1244
  %v1259 = vadd.f32 %v1036, %v1244
  %v1260 = vadd.f32 %v1041, %v1244
  %v1261 = vadd.f32 %v1044, %v1244
  %v1262 = vadd.f32 %v1049, %v1244
  %v1263 = vadd.f32 %v1052, %v1244
  %v1264 = vadd.f32 %v1057, %v1244
  %v1265 = vadd.f32 %v1060, %v1244
  %v1266 = vadd.f32 %v1065, %v1244
  %v1267 = vadd.f32 %v1068, %v1244
  %v1268 = vadd.f32 %v1073, %v1244
  %v1269 = vadd.f32 %v1076, %v1244
  %v1270 = vadd.f32 %v1081, %v1244
  %v1271 = vadd.f32 %v1084, %v1244
  %v1272 = vadd.f32 %v1089, %v1244
  %v1273 = vadd.f32 %v1092, %v1244
  %v1274 = vadd.f32 %v1097, %v1244
  %v1275 = vadd.f32 %v1100, %v1244
  %v1276 = vadd.f32 %v1105, %v1244
  %v1277 = vadd.f32 %v1108, %v1244
  %v1278 = vadd.f32 %v1113, %v1244
  %v1279 = vadd.f32 %v1116, %v1244
  %v1280 = vadd.f32 %v1121, %v1244
  %v1281 = vadd.f32 %v1124, %v1244
  %v1282 = vadd.f32 %v1129, %v1244
  %v1283 = vadd.f32 %v1132, %v1244
  %v1284 = vadd.f32 %v1137, %v1244
  %v1285 = vadd.f32 %v1140, %v1244
  %v1286 = vadd.f32 %v1145, %v1244
  %v1287 = vadd.f32 %v1148, %v1244
  %v1288 = vadd.f32 %v1153, %v1244
  %v1289 = vadd.f32 %v1156, %v1244
  %v1290 = vadd.f32 %v1161, %v1244
  %v1291 = vadd.f32 %v1164, %v1244
  %v1292 = vadd.f32 %v1169, %v1244
  %v1293 = vadd.f32 %v1172, %v1244
  %v1294 = vadd.f32 %v1177, %v1244
  %v1295 = vadd.f32 %v1180, %v1244
  %v1296 = vadd.f32 %v1185, %v1244
  %v1297 = vadd.f32 %v1188, %v1244
  %v1298 = vadd.f32 %v1193, %v1244
  %v1299 = vadd.f32 %v1196, %v1244
  %v1300 = vadd.f32 %v1201, %v1244
  %v1301 = vadd.f32 %v1204, %v1244
  %v1302 = vadd.f32 %v1209, %v1244
  %v1303 = vadd.f32 %v1212, %v1244
  %v1304 = vadd.f32 %v1217, %v1244
  %v1305 = vadd.f32 %v1220, %v1244
  %v1306 = vadd.f32 %v1225, %v1244
  %v1307 = vadd.f32 %v1228, %v1244
  %v1308 = vadd.f32 %v1233, %v1244
  %v1309 = vadd.f32 %v1236, %v1244
  %v1310 = vmax.f32 %v1246, 0.0
  %v1311 = vmax.f32 %v1247, 0.0
  %v1312 = vmax.f32 %v1248, 0.0
  %v1313 = vmax.f32 %v1249, 0.0
  %v1314 = vmax.f32 %v1250, 0.0
  %v1315 = vmax.f32 %v1251, 0.0
  %v1316 = vmax.f32 %v1252, 0.0
  %v1317 = vmax.f32 %v1253, 0.0
  %v1318 = vmax.f32 %v1254, 0.0
  %v1319 = vmax.f32 %v1255, 0.0
  %v1320 = vmax.f32 %v1256, 0.0
  %v1321 = vmax.f32 %v1257, 0.0
  %v1322 = vmax.f32 %v1258, 0.0
  %v1323 = vmax.f32 %v1259, 0.0
  %v1324 = vmax.f32 %v1260, 0.0
  %v1325 = vmax.f32 %v1261, 0.0
  %v1326 = vmax.f32 %v1262, 0.0
  %v1327 = vmax.f32 %v1263, 0.0
  %v1328 = vmax.f32 %v1264, 0.0
  %v1329 = vmax.f32 %v1265, 0.0
  %v1330 = vmax.f32 %v1266, 0.0
  %v1331 = vmax.f32 %v1267, 0.0
  %v1332 = vmax.f32 %v1268, 0.0
  %v1333 = vmax.f32 %v1269, 0.0
  %v1334 = vmax.f32 %v1270, 0.0
  %v1335 = vmax.f32 %v1271, 0.0
  %v1336 = vmax.f32 %v1272, 0.0
  %v1337 = vmax.f32 %v1273, 0.0
  %v1338 = vmax.f32 %v1274, 0.0
  %v1339 = vmax.f32 %v1275, 0.0
  %v1340 = vmax.f32 %v1276, 0.0
  %v1341 = vmax.f32 %v1277, 0.0
  %v1342 = vmax.f32 %v1278, 0.0
  %v1343 = vmax.f32 %v1279, 0.0
  %v1344 = vmax.f32 %v1280, 0.0
  %v1345 = vmax.f32 %v1281, 0.0
  %v1346 = vmax.f32 %v1282, 0.0
  %v1347 = vmax.f32 %v1283, 0.0
  %v1348 = vmax.f32 %v1284, 0.0
  %v1349 = vmax.f32 %v1285, 0.0
  %v1350 = vmax.f32 %v1286, 0.0
  %v1351 = vmax.f32 %v1287, 0.0
  %v1352 = vmax.f32 %v1288, 0.0
  %v1353 = vmax.f32 %v1289, 0.0
  %v1354 = vmax.f32 %v1290, 0.0
  %v1355 = vmax.f32 %v1291, 0.0
  %v1356 = vmax.f32 %v1292, 0.0
  %v1357 = vmax.f32 %v1293, 0.0
  %v1358 = vmax.f32 %v1294, 0.0
  %v1359 = vmax.f32 %v1295, 0.0
  %v1360 = vmax.f32 %v1296, 0.0
  %v1361 = vmax.f32 %v1297, 0.0
  %v1362 = vmax.f32 %v1298, 0.0
  %v1363 = vmax.f32 %v1299, 0.0
  %v1364 = vmax.f32 %v1300, 0.0
  %v1365 = vmax.f32 %v1301, 0.0
  %v1366 = vmax.f32 %v1302, 0.0
  %v1367 = vmax.f32 %v1303, 0.0
  %v1368 = vmax.f32 %v1304, 0.0
  %v1369 = vmax.f32 %v1305, 0.0
  %v1370 = vmax.f32 %v1306, 0.0
  %v1371 = vmax.f32 %v1307, 0.0
  %v1372 = vmax.f32 %v1308, 0.0
  %v1373 = vmax.f32 %v1309, 0.0
  %vm1374 = vcmask 64512
  %1375 = vst.msk [vmem:[%s5] sm:$0xff] %vm1374, %v1310
  %1376 = vst.msk [vmem:[%s5 + $0x8] sm:$0xff] %vm1374, %v1311
  %1377 = vst.msk [vmem:[%s5 + $0x10] sm:$0xff] %vm1374, %v1312
  %1378 = vst.msk [vmem:[%s5 + $0x18] sm:$0xff] %vm1374, %v1313
  %1379 = vst.msk [vmem:[%s5 + $0x20] sm:$0xff] %vm1374, %v1314
  %1380 = vst.msk [vmem:[%s5 + $0x28] sm:$0xff] %vm1374, %v1315
  %1381 = vst.msk [vmem:[%s5 + $0x30] sm:$0xff] %vm1374, %v1316
  %1382 = vst.msk [vmem:[%s5 + $0x38] sm:$0xff] %vm1374, %v1317
  %1383 = vst.msk [vmem:[%s5 + $0x40] sm:$0xff] %vm1374, %v1318
  %1384 = vst.msk [vmem:[%s5 + $0x48] sm:$0xff] %vm1374, %v1319
  %1385 = vst.msk [vmem:[%s5 + $0x50] sm:$0xff] %vm1374, %v1320
  %1386 = vst.msk [vmem:[%s5 + $0x58] sm:$0xff] %vm1374, %v1321
  %1387 = vst.msk [vmem:[%s5 + $0x60] sm:$0xff] %vm1374, %v1322
  %1388 = vst.msk [vmem:[%s5 + $0x68] sm:$0xff] %vm1374, %v1323
  %1389 = vst.msk [vmem:[%s5 + $0x70] sm:$0xff] %vm1374, %v1324
  %1390 = vst.msk [vmem:[%s5 + $0x78] sm:$0xff] %vm1374, %v1325
  %1391 = vst.msk [vmem:[%s5 + $0x80] sm:$0xff] %vm1374, %v1326
  %1392 = vst.msk [vmem:[%s5 + $0x88] sm:$0xff] %vm1374, %v1327
  %1393 = vst.msk [vmem:[%s5 + $0x90] sm:$0xff] %vm1374, %v1328
  %1394 = vst.msk [vmem:[%s5 + $0x98] sm:$0xff] %vm1374, %v1329
  %1395 = vst.msk [vmem:[%s5 + $0xa0] sm:$0xff] %vm1374, %v1330
  %1396 = vst.msk [vmem:[%s5 + $0xa8] sm:$0xff] %vm1374, %v1331
  %1397 = vst.msk [vmem:[%s5 + $0xb0] sm:$0xff] %vm1374, %v1332
  %1398 = vst.msk [vmem:[%s5 + $0xb8] sm:$0xff] %vm1374, %v1333
  %1399 = vst.msk [vmem:[%s5 + $0xc0] sm:$0xff] %vm1374, %v1334
  %1400 = vst.msk [vmem:[%s5 + $0xc8] sm:$0xff] %vm1374, %v1335
  %1401 = vst.msk [vmem:[%s5 + $0xd0] sm:$0xff] %vm1374, %v1336
  %1402 = vst.msk [vmem:[%s5 + $0xd8] sm:$0xff] %vm1374, %v1337
  %1403 = vst.msk [vmem:[%s5 + $0xe0] sm:$0xff] %vm1374, %v1338
  %1404 = vst.msk [vmem:[%s5 + $0xe8] sm:$0xff] %vm1374, %v1339
  %1405 = vst.msk [vmem:[%s5 + $0xf0] sm:$0xff] %vm1374, %v1340
  %1406 = vst.msk [vmem:[%s5 + $0xf8] sm:$0xff] %vm1374, %v1341
  %1407 = vst.msk [vmem:[%s5 + $0x100] sm:$0xff] %vm1374, %v1342
  %1408 = vst.msk [vmem:[%s5 + $0x108] sm:$0xff] %vm1374, %v1343
  %1409 = vst.msk [vmem:[%s5 + $0x110] sm:$0xff] %vm1374, %v1344
  %1410 = vst.msk [vmem:[%s5 + $0x118] sm:$0xff] %vm1374, %v1345
  %1411 = vst.msk [vmem:[%s5 + $0x120] sm:$0xff] %vm1374, %v1346
  %1412 = vst.msk [vmem:[%s5 + $0x128] sm:$0xff] %vm1374, %v1347
  %1413 = vst.msk [vmem:[%s5 + $0x130] sm:$0xff] %vm1374, %v1348
  %1414 = vst.msk [vmem:[%s5 + $0x138] sm:$0xff] %vm1374, %v1349
  %1415 = vst.msk [vmem:[%s5 + $0x140] sm:$0xff] %vm1374, %v1350
  %1416 = vst.msk [vmem:[%s5 + $0x148] sm:$0xff] %vm1374, %v1351
  %1417 = vst.msk [vmem:[%s5 + $0x150] sm:$0xff] %vm1374, %v1352
  %1418 = vst.msk [vmem:[%s5 + $0x158] sm:$0xff] %vm1374, %v1353
  %1419 = vst.msk [vmem:[%s5 + $0x160] sm:$0xff] %vm1374, %v1354
  %1420 = vst.msk [vmem:[%s5 + $0x168] sm:$0xff] %vm1374, %v1355
  %1421 = vst.msk [vmem:[%s5 + $0x170] sm:$0xff] %vm1374, %v1356
  %1422 = vst.msk [vmem:[%s5 + $0x178] sm:$0xff] %vm1374, %v1357
  %1423 = vst.msk [vmem:[%s5 + $0x180] sm:$0xff] %vm1374, %v1358
  %1424 = vst.msk [vmem:[%s5 + $0x188] sm:$0xff] %vm1374, %v1359
  %1425 = vst.msk [vmem:[%s5 + $0x190] sm:$0xff] %vm1374, %v1360
  %1426 = vst.msk [vmem:[%s5 + $0x198] sm:$0xff] %vm1374, %v1361
  %1427 = vst.msk [vmem:[%s5 + $0x1a0] sm:$0xff] %vm1374, %v1362
  %1428 = vst.msk [vmem:[%s5 + $0x1a8] sm:$0xff] %vm1374, %v1363
  %1429 = vst.msk [vmem:[%s5 + $0x1b0] sm:$0xff] %vm1374, %v1364
  %1430 = vst.msk [vmem:[%s5 + $0x1b8] sm:$0xff] %vm1374, %v1365
  %1431 = vst.msk [vmem:[%s5 + $0x1c0] sm:$0xff] %vm1374, %v1366
  %1432 = vst.msk [vmem:[%s5 + $0x1c8] sm:$0xff] %vm1374, %v1367
  %1433 = vst.msk [vmem:[%s5 + $0x1d0] sm:$0xff] %vm1374, %v1368
  %1434 = vst.msk [vmem:[%s5 + $0x1d8] sm:$0xff] %vm1374, %v1369
  %1435 = vst.msk [vmem:[%s5 + $0x1e0] sm:$0xff] %vm1374, %v1370
  %1436 = vst.msk [vmem:[%s5 + $0x1e8] sm:$0xff] %vm1374, %v1371
  %1437 = vst.msk [vmem:[%s5 + $0x1f0] sm:$0xff] %vm1374, %v1372
  %1438 = vst.msk [vmem:[%s5 + $0x1f8] sm:$0xff] %vm1374, %v1373
  // Predicated region
  $region22: #{basic_block_forward.3} parent=0 // pred_check
    _
  $region23: #{basic_block_forward.3} parent=0 // pred_check_branch
    %1440 = sbr.rel (0) target = $region25
  $region24: #{basic_block_forward.3} parent=0 // pred_region
    _
  $region25: #{basic_block_forward.3} parent=0 // pred_fallthru
    _
  // Predicated region
  $region26: #{basic_block_forward.3} parent=0 // pred_check
    _
  $region27: #{basic_block_forward.3} parent=0 // pred_check_branch
    %1442 = sbr.rel (0) target = $region29
  $region28: #{basic_block_forward.3} parent=0 // pred_region
    _
  $region29: #{basic_block_forward.3} parent=0 // pred_fallthru
    _

</llo_original>
